<compile_context>
chip_gen: v5e
topology: v5e:2x2
jax: 0.10.0
libtpu: 0.0.40
codegen_flags: <defaults>
</compile_context>

<pallas_src>
import functools

import jax
import jax.numpy as jnp
from jax import lax
from jax.experimental import pallas as pl
from jax.experimental.pallas import tpu as pltpu


# ------------------------------ model constants ------------------------------

K1, S1, C1 = 12, 4, 16          # conv1: Conv1d(1, 16, 12, stride=4)
K2, S2, C2 = 12, 3, 32          # conv2: Conv1d(16, 32, 12, stride=3)
H = 64                          # GRU hidden size
RF = S1 * (K2 - 1) + K1         # composed receptive field in the raw input = 56
RF_STRIDE = S1 * S2             # composed stride in the raw input = 12

GP = 128                        # lanes per gate tile (gate-packed layout)
G3 = 3 * GP                     # total gate lanes = 384
RF_PAD = 64                     # receptive field padded to a sublane-tile multiple
B_PAD = 8                       # batch padded to the f32 sublane tile


# ------------------------------ fused Pallas kernel ---------------------------

def _convrnn_fused_kernel(x_ref, w_ref, c_ref, o_ref, *, t_steps):
    """Fused fc4(GRU(conv2(conv1(x))))[-1], everything resident in VMEM.

    x_ref: (B_PAD, W_PAD) raw windows, zero padded.
    w_ref: (RF_PAD + GP, G3) = [folded conv1∘conv2∘W_ih ; W_hh], gate-packed.
    c_ref: (8, G3) packed constants: row0 = b_all (gate-packed),
           row1[:H] = b_hn, row2[:H] = fc weight, row3[0] = fc bias.
    o_ref: (B_PAD, 1).
    """
    x = x_ref[...]                                    # (8, W_PAD): one lane tile wide
    w_all = w_ref[0:RF_PAD, :]                        # (64, 384), rows RF:64 zero
    w_hh = w_ref[RF_PAD:RF_PAD + GP, :]               # (128, 384), rows H:128 zero
    b_all = c_ref[0:1, :]                             # (1, 384)
    b_hn = c_ref[1:2, 0:GP]                           # (1, 128), lanes H:128 zero
    w_fc = c_ref[2:3, 0:GP]                           # (1, 128), lanes H:128 zero
    b_fc = c_ref[3:4, 0:1]                            # (1, 1)

    # Input-side gate pre-activations for every timestep, hoisted off the
    # recurrence: one small MXU dot per step over the composed receptive field.
    # (Window slices read from the single x vreg; the extra lanes RF:64 of each
    #  window hit guaranteed-zero rows of w_all.)
    gx = [jnp.dot(x[:, t * RF_STRIDE:t * RF_STRIDE + RF_PAD], w_all,
                  preferred_element_type=jnp.float32) + b_all
          for t in range(t_steps)]                    # each (8, 384)

    # Serial GRU recurrence (torch gate order [r, z, n]); h is one (8,128) vreg,
    # all gate slices below are 128-lane-tile aligned.  h padding lanes stay 0.
    h = jnp.zeros((x.shape[0], GP), jnp.float32)
    for t in range(t_steps):                          # static unroll (T small)
        gh = jnp.dot(h, w_hh, preferred_element_type=jnp.float32)      # (8, 384)
        r = jax.nn.sigmoid(gx[t][:, 0:GP] + gh[:, 0:GP])
        z = jax.nn.sigmoid(gx[t][:, GP:2 * GP] + gh[:, GP:2 * GP])
        n = jnp.tanh(gx[t][:, 2 * GP:3 * GP] + r * (gh[:, 2 * GP:3 * GP] + b_hn))
        h = (1.0 - z) * n + z * h

    # Final Linear on the last hidden state: lane reduce (XLU) + bias.
    o_ref[...] = jnp.sum(h * w_fc, axis=-1, keepdims=True) + b_fc      # (8, 1)


@jax.jit
def conv_rnn_forward(x, kp):
    """x: (B, window_len, 1) float32 -> (B, 1) float32 (torch forward with h0 = 0)."""
    b, w, _ = x.shape
    l1 = (w - K1) // S1 + 1
    t_steps = (l1 - K2) // S2 + 1                     # GRU sequence length

    # Pad batch to the sublane tile and the window to a lane tile that covers the
    # last (64-wide) receptive-field slice.
    w_pad = max(w, (t_steps - 1) * RF_STRIDE + RF_PAD)
    w_pad = ((w_pad + 127) // 128) * 128
    b_pad = ((b + B_PAD - 1) // B_PAD) * B_PAD
    xs = jnp.zeros((b_pad, w_pad), jnp.float32).at[:b, :w].set(x[:, :, 0])

    vmem = pl.BlockSpec(memory_space=pltpu.MemorySpace.VMEM)
    out = pl.pallas_call(
        functools.partial(_convrnn_fused_kernel, t_steps=t_steps),
        out_shape=jax.ShapeDtypeStruct((b_pad, 1), jnp.float32),
        in_specs=[vmem, vmem, vmem],
        out_specs=vmem,
    )(xs, kp["w_stack"], kp["consts"])
    return out[:b]


# ----------------------------- params & weight folding ------------------------

def init_raw_params(key):
    """Torch-layout parameters (same init scheme as torch defaults)."""
    ks = jax.random.split(key, 10)

    def unif(k, shape, fan_in):
        bound = 1.0 / jnp.sqrt(float(fan_in))
        return jax.random.uniform(k, shape, jnp.float32, -bound, bound)

    return dict(
        w1=unif(ks[0], (C1, 1, K1), 1 * K1),    b1=unif(ks[1], (C1,), 1 * K1),
        w2=unif(ks[2], (C2, C1, K2), C1 * K2),  b2=unif(ks[3], (C2,), C1 * K2),
        wih=unif(ks[4], (3 * H, C2), H),        whh=unif(ks[5], (3 * H, H), H),
        bih=unif(ks[6], (3 * H,), H),           bhh=unif(ks[7], (3 * H,), H),
        wfc=unif(ks[8], (1, H), H),             bfc=unif(ks[9], (1,), H),
    )


def _gate_pack(w):
    """(rows, 3H) -> (rows, 3*GP): each gate gets its own 128-lane tile (upper 64 zero)."""
    rows = w.shape[0]
    out = jnp.zeros((rows, G3), jnp.float32)
    for g in range(3):
        out = out.at[:, g * GP:g * GP + H].set(w[:, g * H:(g + 1) * H])
    return out


def fold_params(p):
    """Fold conv1∘conv2∘W_ih (+ mergeable biases) at init; gate-pack and stack operands.

    gx_t = x[b, 12t : 12t+56] @ w_all + b_all equals the torch input-gate
    pre-activations W_ih @ conv2(conv1(x))[:, :, t] + b_ih (+ b_hh for r, z).
    """
    hp = lax.Precision.HIGHEST
    wx = p["wih"].T                                              # (C2, 3H)
    # conv2 ∘ W_ih :  M[c1, k2, g] = sum_c2 w2[c2, c1, k2] * wih[g, c2]
    m = jnp.einsum("oik,og->ikg", p["w2"], wx, precision=hp)     # (C1, K2, 3H)
    w1m = p["w1"][:, 0, :].T                                     # (K1, C1)

    w_all = jnp.zeros((RF, 3 * H), jnp.float32)
    for k2 in range(K2):                                         # overlap-add over k2
        w_all = w_all.at[S1 * k2:S1 * k2 + K1, :].add(
            jnp.einsum("kc,cg->kg", w1m, m[:, k2, :], precision=hp))

    bih, bhh = p["bih"], p["bhh"]
    # merge b_ih+b_hh for r and z; b_hn must stay inside r*(...) -> kept separate.
    bx = jnp.concatenate([bih[:H] + bhh[:H], bih[H:2 * H] + bhh[H:2 * H], bih[2 * H:]])
    b_all = (bx + jnp.einsum("o,og->g", p["b2"], wx, precision=hp)
                + jnp.einsum("i,ikg->g", p["b1"], m, precision=hp))   # (3H,)

    # Gate-packed, sublane-padded weight stack:
    #   rows [0:64)   folded input-side weight (rows RF:64 zero)
    #   rows [64:192) W_hh for the (8,128) h vreg (rows H:128 of the block zero).
    w_all_p = jnp.zeros((RF_PAD, G3), jnp.float32).at[:RF].set(_gate_pack(w_all))
    w_hh_p = jnp.zeros((GP, G3), jnp.float32).at[:H].set(_gate_pack(p["whh"].T))
    w_stack = jnp.concatenate([w_all_p, w_hh_p], axis=0)         # (192, 384)

    consts = jnp.zeros((8, G3), jnp.float32)
    consts = consts.at[0, :].set(_gate_pack(b_all[None, :])[0])  # b_all (gate-packed)
    consts = consts.at[1, :H].set(bhh[2 * H:])                   # b_hn
    consts = consts.at[2, :H].set(p["wfc"][0])                   # fc weight row
    consts = consts.at[3, 0].set(p["bfc"][0])                    # fc bias
    return dict(w_stack=w_stack, consts=consts)


# ----------------------------- pure-JAX reference -----------------------------
# Unfolded, structured exactly like the torch module (validates the folding too).

def ref_forward(x, p):
    hp = lax.Precision.HIGHEST
    b, w, _ = x.shape
    l1 = (w - K1) // S1 + 1
    l2 = (l1 - K2) // S2 + 1
    xs = x[:, :, 0]

    idx1 = jnp.arange(l1)[:, None] * S1 + jnp.arange(K1)[None, :]
    p1 = xs[:, idx1]                                             # (B, L1, K1)
    w1m = p["w1"][:, 0, :].T                                     # (K1, C1)
    y1 = jnp.einsum("blk,kc->blc", p1, w1m, precision=hp) + p["b1"]

    idx2 = jnp.arange(l2)[:, None] * S2 + jnp.arange(K2)[None, :]
    p2 = y1[:, idx2, :]                                          # (B, L2, K2, C1)
    w2m = p["w2"].transpose(2, 1, 0)                             # (K2, C1, C2)
    y2 = jnp.einsum("blkc,kcd->bld", p2, w2m, precision=hp) + p["b2"]
    x_seq = y2.transpose(1, 0, 2)                                # (L2, B, C2)

    wih, whh, bih, bhh = p["wih"], p["whh"], p["bih"], p["bhh"]
    wxr, wxz, wxn = wih[:H].T, wih[H:2 * H].T, wih[2 * H:].T
    whr, whz, whn = whh[:H].T, whh[H:2 * H].T, whh[2 * H:].T
    bxr, bxz, bxn = bih[:H], bih[H:2 * H], bih[2 * H:]
    bhr, bhz, bhn = bhh[:H], bhh[H:2 * H], bhh[2 * H:]

    def step(h, xt):
        r = jax.nn.sigmoid(jnp.dot(xt, wxr, precision=hp) + bxr
                           + jnp.dot(h, whr, precision=hp) + bhr)
        z = jax.nn.sigmoid(jnp.dot(xt, wxz, precision=hp) + bxz
                           + jnp.dot(h, whz, precision=hp) + bhz)
        n = jnp.tanh(jnp.dot(xt, wxn, precision=hp) + bxn
                     + r * (jnp.dot(h, whn, precision=hp) + bhn))
        return (1.0 - z) * n + z * h, None

    h_t, _ = lax.scan(step, jnp.zeros((b, H), jnp.float32), x_seq)
    return jnp.dot(h_t, p["wfc"].T, precision=hp) + p["bfc"]     # fc4(h_T) == fc4(gru_out)[-1]


# ----------------------------------- main --------------------------------------

if __name__ == "__main__":
    batch, window_len = 4, 120          # -> L1 = 28, L2 = 6 (GRU seq len)
    key = jax.random.PRNGKey(0)
    kx, kp = jax.random.split(key)

    x = jax.random.normal(kx, (batch, window_len, 1), jnp.float32)
    raw = init_raw_params(kp)
    kparams = fold_params(raw)

    out = jax.block_until_ready(conv_rnn_forward(x, kparams))

    ref = ref_forward(x, raw)
    assert out.shape == (batch, 1)
    assert jnp.allclose(out, ref, atol=1e-3, rtol=1e-3), (out, ref)

    print("KERNEL_OK")
</pallas_src>

<mosaic_0001>
module attributes {stable_mosaic.version = 11 : i64} {
  func.func @_convrnn_fused_kernel(%arg0: memref<8x128xf32, #tpu.memory_space<vmem>>, %arg1: memref<192x384xf32, #tpu.memory_space<vmem>>, %arg2: memref<8x384xf32, #tpu.memory_space<vmem>>, %arg3: memref<8x1xf32, #tpu.memory_space<vmem>>) attributes {dimension_semantics = [], scalar_prefetch = 0 : i64, scratch_operands = 0 : i64, tpu.core_type = #tpu.core_type<tc>} {
    %c0 = arith.constant 0 : index
    %c0_0 = arith.constant 0 : index
    %0 = vector.load %arg0[%c0, %c0_0] : memref<8x128xf32, #tpu.memory_space<vmem>>, vector<8x128xf32>
    %c0_1 = arith.constant 0 : index
    %c0_2 = arith.constant 0 : index
    %1 = vector.load %arg1[%c0_1, %c0_2] : memref<192x384xf32, #tpu.memory_space<vmem>>, vector<64x384xf32>
    %c64 = arith.constant 64 : index
    %c0_3 = arith.constant 0 : index
    %2 = vector.load %arg1[%c64, %c0_3] : memref<192x384xf32, #tpu.memory_space<vmem>>, vector<128x384xf32>
    %c0_4 = arith.constant 0 : index
    %c0_5 = arith.constant 0 : index
    %3 = vector.load %arg2[%c0_4, %c0_5] : memref<8x384xf32, #tpu.memory_space<vmem>>, vector<1x384xf32>
    %c1 = arith.constant 1 : index
    %c0_6 = arith.constant 0 : index
    %4 = vector.load %arg2[%c1, %c0_6] : memref<8x384xf32, #tpu.memory_space<vmem>>, vector<1x128xf32>
    %c2 = arith.constant 2 : index
    %c0_7 = arith.constant 0 : index
    %5 = vector.load %arg2[%c2, %c0_7] : memref<8x384xf32, #tpu.memory_space<vmem>>, vector<1x128xf32>
    %c3 = arith.constant 3 : index
    %c0_8 = arith.constant 0 : index
    %6 = vector.load %arg2[%c3, %c0_8] : memref<8x384xf32, #tpu.memory_space<vmem>>, vector<1x1xf32>
    %7 = vector.extract_strided_slice %0 {offsets = [0, 0], sizes = [8, 64], strides = [1, 1]} : vector<8x128xf32> to vector<8x64xf32>
    %cst = arith.constant dense<0.000000e+00> : vector<8x384xf32>
    %8 = tpu.matmul %7, %1, %cst {dimension_numbers = #tpu.dot_dimension_numbers<[1], [0], [0], [1], [0, 0, 1, 1], [], []>} : vector<8x64xf32>, vector<64x384xf32>, vector<8x384xf32> -> vector<8x384xf32>
    %9 = vector.broadcast %3 : vector<1x384xf32> to vector<8x384xf32>
    %10 = arith.addf %8, %9 : vector<8x384xf32>
    %11 = vector.extract_strided_slice %0 {offsets = [0, 12], sizes = [8, 64], strides = [1, 1]} : vector<8x128xf32> to vector<8x64xf32>
    %cst_9 = arith.constant dense<0.000000e+00> : vector<8x384xf32>
    %12 = tpu.matmul %11, %1, %cst_9 {dimension_numbers = #tpu.dot_dimension_numbers<[1], [0], [0], [1], [0, 0, 1, 1], [], []>} : vector<8x64xf32>, vector<64x384xf32>, vector<8x384xf32> -> vector<8x384xf32>
    %13 = vector.broadcast %3 : vector<1x384xf32> to vector<8x384xf32>
    %14 = arith.addf %12, %13 : vector<8x384xf32>
    %15 = vector.extract_strided_slice %0 {offsets = [0, 24], sizes = [8, 64], strides = [1, 1]} : vector<8x128xf32> to vector<8x64xf32>
    %cst_10 = arith.constant dense<0.000000e+00> : vector<8x384xf32>
    %16 = tpu.matmul %15, %1, %cst_10 {dimension_numbers = #tpu.dot_dimension_numbers<[1], [0], [0], [1], [0, 0, 1, 1], [], []>} : vector<8x64xf32>, vector<64x384xf32>, vector<8x384xf32> -> vector<8x384xf32>
    %17 = vector.broadcast %3 : vector<1x384xf32> to vector<8x384xf32>
    %18 = arith.addf %16, %17 : vector<8x384xf32>
    %19 = vector.extract_strided_slice %0 {offsets = [0, 36], sizes = [8, 64], strides = [1, 1]} : vector<8x128xf32> to vector<8x64xf32>
    %cst_11 = arith.constant dense<0.000000e+00> : vector<8x384xf32>
    %20 = tpu.matmul %19, %1, %cst_11 {dimension_numbers = #tpu.dot_dimension_numbers<[1], [0], [0], [1], [0, 0, 1, 1], [], []>} : vector<8x64xf32>, vector<64x384xf32>, vector<8x384xf32> -> vector<8x384xf32>
    %21 = vector.broadcast %3 : vector<1x384xf32> to vector<8x384xf32>
    %22 = arith.addf %20, %21 : vector<8x384xf32>
    %23 = vector.extract_strided_slice %0 {offsets = [0, 48], sizes = [8, 64], strides = [1, 1]} : vector<8x128xf32> to vector<8x64xf32>
    %cst_12 = arith.constant dense<0.000000e+00> : vector<8x384xf32>
    %24 = tpu.matmul %23, %1, %cst_12 {dimension_numbers = #tpu.dot_dimension_numbers<[1], [0], [0], [1], [0, 0, 1, 1], [], []>} : vector<8x64xf32>, vector<64x384xf32>, vector<8x384xf32> -> vector<8x384xf32>
    %25 = vector.broadcast %3 : vector<1x384xf32> to vector<8x384xf32>
    %26 = arith.addf %24, %25 : vector<8x384xf32>
    %27 = vector.extract_strided_slice %0 {offsets = [0, 60], sizes = [8, 64], strides = [1, 1]} : vector<8x128xf32> to vector<8x64xf32>
    %cst_13 = arith.constant dense<0.000000e+00> : vector<8x384xf32>
    %28 = tpu.matmul %27, %1, %cst_13 {dimension_numbers = #tpu.dot_dimension_numbers<[1], [0], [0], [1], [0, 0, 1, 1], [], []>} : vector<8x64xf32>, vector<64x384xf32>, vector<8x384xf32> -> vector<8x384xf32>
    %29 = vector.broadcast %3 : vector<1x384xf32> to vector<8x384xf32>
    %30 = arith.addf %28, %29 : vector<8x384xf32>
    %cst_14 = arith.constant 0.000000e+00 : f32
    %31 = vector.broadcast %cst_14 : f32 to vector<8x128xf32>
    %cst_15 = arith.constant dense<0.000000e+00> : vector<8x384xf32>
    %32 = tpu.matmul %31, %2, %cst_15 {dimension_numbers = #tpu.dot_dimension_numbers<[1], [0], [0], [1], [0, 0, 1, 1], [], []>} : vector<8x128xf32>, vector<128x384xf32>, vector<8x384xf32> -> vector<8x384xf32>
    %33 = vector.extract_strided_slice %10 {offsets = [0, 0], sizes = [8, 128], strides = [1, 1]} : vector<8x384xf32> to vector<8x128xf32>
    %34 = vector.extract_strided_slice %32 {offsets = [0, 0], sizes = [8, 128], strides = [1, 1]} : vector<8x384xf32> to vector<8x128xf32>
    %35 = arith.addf %33, %34 : vector<8x128xf32>
    %36 = arith.negf %35 : vector<8x128xf32>
    %37 = math.exp %36 : vector<8x128xf32>
    %cst_16 = arith.constant 1.000000e+00 : f32
    %38 = vector.broadcast %cst_16 : f32 to vector<8x128xf32>
    %39 = arith.addf %38, %37 : vector<8x128xf32>
    %40 = arith.divf %38, %39 : vector<8x128xf32>
    %41 = vector.extract_strided_slice %10 {offsets = [0, 128], sizes = [8, 128], strides = [1, 1]} : vector<8x384xf32> to vector<8x128xf32>
    %42 = vector.extract_strided_slice %32 {offsets = [0, 128], sizes = [8, 128], strides = [1, 1]} : vector<8x384xf32> to vector<8x128xf32>
    %43 = arith.addf %41, %42 : vector<8x128xf32>
    %44 = arith.negf %43 : vector<8x128xf32>
    %45 = math.exp %44 : vector<8x128xf32>
    %cst_17 = arith.constant 1.000000e+00 : f32
    %46 = vector.broadcast %cst_17 : f32 to vector<8x128xf32>
    %47 = arith.addf %46, %45 : vector<8x128xf32>
    %48 = arith.divf %46, %47 : vector<8x128xf32>
    %49 = vector.extract_strided_slice %10 {offsets = [0, 256], sizes = [8, 128], strides = [1, 1]} : vector<8x384xf32> to vector<8x128xf32>
    %50 = vector.extract_strided_slice %32 {offsets = [0, 256], sizes = [8, 128], strides = [1, 1]} : vector<8x384xf32> to vector<8x128xf32>
    %51 = vector.broadcast %4 : vector<1x128xf32> to vector<8x128xf32>
    %52 = arith.addf %50, %51 : vector<8x128xf32>
    %53 = arith.mulf %40, %52 : vector<8x128xf32>
    %54 = arith.addf %49, %53 : vector<8x128xf32>
    %55 = math.tanh %54 : vector<8x128xf32>
    %cst_18 = arith.constant 1.000000e+00 : f32
    %56 = vector.broadcast %cst_18 : f32 to vector<8x128xf32>
    %57 = arith.subf %56, %48 : vector<8x128xf32>
    %58 = arith.mulf %57, %55 : vector<8x128xf32>
    %59 = arith.mulf %48, %31 : vector<8x128xf32>
    %60 = arith.addf %58, %59 : vector<8x128xf32>
    %cst_19 = arith.constant dense<0.000000e+00> : vector<8x384xf32>
    %61 = tpu.matmul %60, %2, %cst_19 {dimension_numbers = #tpu.dot_dimension_numbers<[1], [0], [0], [1], [0, 0, 1, 1], [], []>} : vector<8x128xf32>, vector<128x384xf32>, vector<8x384xf32> -> vector<8x384xf32>
    %62 = vector.extract_strided_slice %14 {offsets = [0, 0], sizes = [8, 128], strides = [1, 1]} : vector<8x384xf32> to vector<8x128xf32>
    %63 = vector.extract_strided_slice %61 {offsets = [0, 0], sizes = [8, 128], strides = [1, 1]} : vector<8x384xf32> to vector<8x128xf32>
    %64 = arith.addf %62, %63 : vector<8x128xf32>
    %65 = arith.negf %64 : vector<8x128xf32>
    %66 = math.exp %65 : vector<8x128xf32>
    %cst_20 = arith.constant 1.000000e+00 : f32
    %67 = vector.broadcast %cst_20 : f32 to vector<8x128xf32>
    %68 = arith.addf %67, %66 : vector<8x128xf32>
    %69 = arith.divf %67, %68 : vector<8x128xf32>
    %70 = vector.extract_strided_slice %14 {offsets = [0, 128], sizes = [8, 128], strides = [1, 1]} : vector<8x384xf32> to vector<8x128xf32>
    %71 = vector.extract_strided_slice %61 {offsets = [0, 128], sizes = [8, 128], strides = [1, 1]} : vector<8x384xf32> to vector<8x128xf32>
    %72 = arith.addf %70, %71 : vector<8x128xf32>
    %73 = arith.negf %72 : vector<8x128xf32>
    %74 = math.exp %73 : vector<8x128xf32>
    %cst_21 = arith.constant 1.000000e+00 : f32
    %75 = vector.broadcast %cst_21 : f32 to vector<8x128xf32>
    %76 = arith.addf %75, %74 : vector<8x128xf32>
    %77 = arith.divf %75, %76 : vector<8x128xf32>
    %78 = vector.extract_strided_slice %14 {offsets = [0, 256], sizes = [8, 128], strides = [1, 1]} : vector<8x384xf32> to vector<8x128xf32>
    %79 = vector.extract_strided_slice %61 {offsets = [0, 256], sizes = [8, 128], strides = [1, 1]} : vector<8x384xf32> to vector<8x128xf32>
    %80 = vector.broadcast %4 : vector<1x128xf32> to vector<8x128xf32>
    %81 = arith.addf %79, %80 : vector<8x128xf32>
    %82 = arith.mulf %69, %81 : vector<8x128xf32>
    %83 = arith.addf %78, %82 : vector<8x128xf32>
    %84 = math.tanh %83 : vector<8x128xf32>
    %cst_22 = arith.constant 1.000000e+00 : f32
    %85 = vector.broadcast %cst_22 : f32 to vector<8x128xf32>
    %86 = arith.subf %85, %77 : vector<8x128xf32>
    %87 = arith.mulf %86, %84 : vector<8x128xf32>
    %88 = arith.mulf %77, %60 : vector<8x128xf32>
    %89 = arith.addf %87, %88 : vector<8x128xf32>
    %cst_23 = arith.constant dense<0.000000e+00> : vector<8x384xf32>
    %90 = tpu.matmul %89, %2, %cst_23 {dimension_numbers = #tpu.dot_dimension_numbers<[1], [0], [0], [1], [0, 0, 1, 1], [], []>} : vector<8x128xf32>, vector<128x384xf32>, vector<8x384xf32> -> vector<8x384xf32>
    %91 = vector.extract_strided_slice %18 {offsets = [0, 0], sizes = [8, 128], strides = [1, 1]} : vector<8x384xf32> to vector<8x128xf32>
    %92 = vector.extract_strided_slice %90 {offsets = [0, 0], sizes = [8, 128], strides = [1, 1]} : vector<8x384xf32> to vector<8x128xf32>
    %93 = arith.addf %91, %92 : vector<8x128xf32>
    %94 = arith.negf %93 : vector<8x128xf32>
    %95 = math.exp %94 : vector<8x128xf32>
    %cst_24 = arith.constant 1.000000e+00 : f32
    %96 = vector.broadcast %cst_24 : f32 to vector<8x128xf32>
    %97 = arith.addf %96, %95 : vector<8x128xf32>
    %98 = arith.divf %96, %97 : vector<8x128xf32>
    %99 = vector.extract_strided_slice %18 {offsets = [0, 128], sizes = [8, 128], strides = [1, 1]} : vector<8x384xf32> to vector<8x128xf32>
    %100 = vector.extract_strided_slice %90 {offsets = [0, 128], sizes = [8, 128], strides = [1, 1]} : vector<8x384xf32> to vector<8x128xf32>
    %101 = arith.addf %99, %100 : vector<8x128xf32>
    %102 = arith.negf %101 : vector<8x128xf32>
    %103 = math.exp %102 : vector<8x128xf32>
    %cst_25 = arith.constant 1.000000e+00 : f32
    %104 = vector.broadcast %cst_25 : f32 to vector<8x128xf32>
    %105 = arith.addf %104, %103 : vector<8x128xf32>
    %106 = arith.divf %104, %105 : vector<8x128xf32>
    %107 = vector.extract_strided_slice %18 {offsets = [0, 256], sizes = [8, 128], strides = [1, 1]} : vector<8x384xf32> to vector<8x128xf32>
    %108 = vector.extract_strided_slice %90 {offsets = [0, 256], sizes = [8, 128], strides = [1, 1]} : vector<8x384xf32> to vector<8x128xf32>
    %109 = vector.broadcast %4 : vector<1x128xf32> to vector<8x128xf32>
    %110 = arith.addf %108, %109 : vector<8x128xf32>
    %111 = arith.mulf %98, %110 : vector<8x128xf32>
    %112 = arith.addf %107, %111 : vector<8x128xf32>
    %113 = math.tanh %112 : vector<8x128xf32>
    %cst_26 = arith.constant 1.000000e+00 : f32
    %114 = vector.broadcast %cst_26 : f32 to vector<8x128xf32>
    %115 = arith.subf %114, %106 : vector<8x128xf32>
    %116 = arith.mulf %115, %113 : vector<8x128xf32>
    %117 = arith.mulf %106, %89 : vector<8x128xf32>
    %118 = arith.addf %116, %117 : vector<8x128xf32>
    %cst_27 = arith.constant dense<0.000000e+00> : vector<8x384xf32>
    %119 = tpu.matmul %118, %2, %cst_27 {dimension_numbers = #tpu.dot_dimension_numbers<[1], [0], [0], [1], [0, 0, 1, 1], [], []>} : vector<8x128xf32>, vector<128x384xf32>, vector<8x384xf32> -> vector<8x384xf32>
    %120 = vector.extract_strided_slice %22 {offsets = [0, 0], sizes = [8, 128], strides = [1, 1]} : vector<8x384xf32> to vector<8x128xf32>
    %121 = vector.extract_strided_slice %119 {offsets = [0, 0], sizes = [8, 128], strides = [1, 1]} : vector<8x384xf32> to vector<8x128xf32>
    %122 = arith.addf %120, %121 : vector<8x128xf32>
    %123 = arith.negf %122 : vector<8x128xf32>
    %124 = math.exp %123 : vector<8x128xf32>
    %cst_28 = arith.constant 1.000000e+00 : f32
    %125 = vector.broadcast %cst_28 : f32 to vector<8x128xf32>
    %126 = arith.addf %125, %124 : vector<8x128xf32>
    %127 = arith.divf %125, %126 : vector<8x128xf32>
    %128 = vector.extract_strided_slice %22 {offsets = [0, 128], sizes = [8, 128], strides = [1, 1]} : vector<8x384xf32> to vector<8x128xf32>
    %129 = vector.extract_strided_slice %119 {offsets = [0, 128], sizes = [8, 128], strides = [1, 1]} : vector<8x384xf32> to vector<8x128xf32>
    %130 = arith.addf %128, %129 : vector<8x128xf32>
    %131 = arith.negf %130 : vector<8x128xf32>
    %132 = math.exp %131 : vector<8x128xf32>
    %cst_29 = arith.constant 1.000000e+00 : f32
    %133 = vector.broadcast %cst_29 : f32 to vector<8x128xf32>
    %134 = arith.addf %133, %132 : vector<8x128xf32>
    %135 = arith.divf %133, %134 : vector<8x128xf32>
    %136 = vector.extract_strided_slice %22 {offsets = [0, 256], sizes = [8, 128], strides = [1, 1]} : vector<8x384xf32> to vector<8x128xf32>
    %137 = vector.extract_strided_slice %119 {offsets = [0, 256], sizes = [8, 128], strides = [1, 1]} : vector<8x384xf32> to vector<8x128xf32>
    %138 = vector.broadcast %4 : vector<1x128xf32> to vector<8x128xf32>
    %139 = arith.addf %137, %138 : vector<8x128xf32>
    %140 = arith.mulf %127, %139 : vector<8x128xf32>
    %141 = arith.addf %136, %140 : vector<8x128xf32>
    %142 = math.tanh %141 : vector<8x128xf32>
    %cst_30 = arith.constant 1.000000e+00 : f32
    %143 = vector.broadcast %cst_30 : f32 to vector<8x128xf32>
    %144 = arith.subf %143, %135 : vector<8x128xf32>
    %145 = arith.mulf %144, %142 : vector<8x128xf32>
    %146 = arith.mulf %135, %118 : vector<8x128xf32>
    %147 = arith.addf %145, %146 : vector<8x128xf32>
    %cst_31 = arith.constant dense<0.000000e+00> : vector<8x384xf32>
    %148 = tpu.matmul %147, %2, %cst_31 {dimension_numbers = #tpu.dot_dimension_numbers<[1], [0], [0], [1], [0, 0, 1, 1], [], []>} : vector<8x128xf32>, vector<128x384xf32>, vector<8x384xf32> -> vector<8x384xf32>
    %149 = vector.extract_strided_slice %26 {offsets = [0, 0], sizes = [8, 128], strides = [1, 1]} : vector<8x384xf32> to vector<8x128xf32>
    %150 = vector.extract_strided_slice %148 {offsets = [0, 0], sizes = [8, 128], strides = [1, 1]} : vector<8x384xf32> to vector<8x128xf32>
    %151 = arith.addf %149, %150 : vector<8x128xf32>
    %152 = arith.negf %151 : vector<8x128xf32>
    %153 = math.exp %152 : vector<8x128xf32>
    %cst_32 = arith.constant 1.000000e+00 : f32
    %154 = vector.broadcast %cst_32 : f32 to vector<8x128xf32>
    %155 = arith.addf %154, %153 : vector<8x128xf32>
    %156 = arith.divf %154, %155 : vector<8x128xf32>
    %157 = vector.extract_strided_slice %26 {offsets = [0, 128], sizes = [8, 128], strides = [1, 1]} : vector<8x384xf32> to vector<8x128xf32>
    %158 = vector.extract_strided_slice %148 {offsets = [0, 128], sizes = [8, 128], strides = [1, 1]} : vector<8x384xf32> to vector<8x128xf32>
    %159 = arith.addf %157, %158 : vector<8x128xf32>
    %160 = arith.negf %159 : vector<8x128xf32>
    %161 = math.exp %160 : vector<8x128xf32>
    %cst_33 = arith.constant 1.000000e+00 : f32
    %162 = vector.broadcast %cst_33 : f32 to vector<8x128xf32>
    %163 = arith.addf %162, %161 : vector<8x128xf32>
    %164 = arith.divf %162, %163 : vector<8x128xf32>
    %165 = vector.extract_strided_slice %26 {offsets = [0, 256], sizes = [8, 128], strides = [1, 1]} : vector<8x384xf32> to vector<8x128xf32>
    %166 = vector.extract_strided_slice %148 {offsets = [0, 256], sizes = [8, 128], strides = [1, 1]} : vector<8x384xf32> to vector<8x128xf32>
    %167 = vector.broadcast %4 : vector<1x128xf32> to vector<8x128xf32>
    %168 = arith.addf %166, %167 : vector<8x128xf32>
    %169 = arith.mulf %156, %168 : vector<8x128xf32>
    %170 = arith.addf %165, %169 : vector<8x128xf32>
    %171 = math.tanh %170 : vector<8x128xf32>
    %cst_34 = arith.constant 1.000000e+00 : f32
    %172 = vector.broadcast %cst_34 : f32 to vector<8x128xf32>
    %173 = arith.subf %172, %164 : vector<8x128xf32>
    %174 = arith.mulf %173, %171 : vector<8x128xf32>
    %175 = arith.mulf %164, %147 : vector<8x128xf32>
    %176 = arith.addf %174, %175 : vector<8x128xf32>
    %cst_35 = arith.constant dense<0.000000e+00> : vector<8x384xf32>
    %177 = tpu.matmul %176, %2, %cst_35 {dimension_numbers = #tpu.dot_dimension_numbers<[1], [0], [0], [1], [0, 0, 1, 1], [], []>} : vector<8x128xf32>, vector<128x384xf32>, vector<8x384xf32> -> vector<8x384xf32>
    %178 = vector.extract_strided_slice %30 {offsets = [0, 0], sizes = [8, 128], strides = [1, 1]} : vector<8x384xf32> to vector<8x128xf32>
    %179 = vector.extract_strided_slice %177 {offsets = [0, 0], sizes = [8, 128], strides = [1, 1]} : vector<8x384xf32> to vector<8x128xf32>
    %180 = arith.addf %178, %179 : vector<8x128xf32>
    %181 = arith.negf %180 : vector<8x128xf32>
    %182 = math.exp %181 : vector<8x128xf32>
    %cst_36 = arith.constant 1.000000e+00 : f32
    %183 = vector.broadcast %cst_36 : f32 to vector<8x128xf32>
    %184 = arith.addf %183, %182 : vector<8x128xf32>
    %185 = arith.divf %183, %184 : vector<8x128xf32>
    %186 = vector.extract_strided_slice %30 {offsets = [0, 128], sizes = [8, 128], strides = [1, 1]} : vector<8x384xf32> to vector<8x128xf32>
    %187 = vector.extract_strided_slice %177 {offsets = [0, 128], sizes = [8, 128], strides = [1, 1]} : vector<8x384xf32> to vector<8x128xf32>
    %188 = arith.addf %186, %187 : vector<8x128xf32>
    %189 = arith.negf %188 : vector<8x128xf32>
    %190 = math.exp %189 : vector<8x128xf32>
    %cst_37 = arith.constant 1.000000e+00 : f32
    %191 = vector.broadcast %cst_37 : f32 to vector<8x128xf32>
    %192 = arith.addf %191, %190 : vector<8x128xf32>
    %193 = arith.divf %191, %192 : vector<8x128xf32>
    %194 = vector.extract_strided_slice %30 {offsets = [0, 256], sizes = [8, 128], strides = [1, 1]} : vector<8x384xf32> to vector<8x128xf32>
    %195 = vector.extract_strided_slice %177 {offsets = [0, 256], sizes = [8, 128], strides = [1, 1]} : vector<8x384xf32> to vector<8x128xf32>
    %196 = vector.broadcast %4 : vector<1x128xf32> to vector<8x128xf32>
    %197 = arith.addf %195, %196 : vector<8x128xf32>
    %198 = arith.mulf %185, %197 : vector<8x128xf32>
    %199 = arith.addf %194, %198 : vector<8x128xf32>
    %200 = math.tanh %199 : vector<8x128xf32>
    %cst_38 = arith.constant 1.000000e+00 : f32
    %201 = vector.broadcast %cst_38 : f32 to vector<8x128xf32>
    %202 = arith.subf %201, %193 : vector<8x128xf32>
    %203 = arith.mulf %202, %200 : vector<8x128xf32>
    %204 = arith.mulf %193, %176 : vector<8x128xf32>
    %205 = arith.addf %203, %204 : vector<8x128xf32>
    %206 = vector.broadcast %5 : vector<1x128xf32> to vector<8x128xf32>
    %207 = arith.mulf %205, %206 : vector<8x128xf32>
    %cst_39 = arith.constant dense<0.000000e+00> : vector<8xf32>
    %208 = vector.multi_reduction <add>, %207, %cst_39 [1] : vector<8x128xf32> to vector<8xf32>
    %209 = vector.shape_cast %208 : vector<8xf32> to vector<8x1xf32>
    %210 = vector.broadcast %6 : vector<1x1xf32> to vector<8x1xf32>
    %211 = arith.addf %209, %210 : vector<8x1xf32>
    %c0_40 = arith.constant 0 : index
    %c0_41 = arith.constant 0 : index
    %212 = vector.load %arg3[%c0_40, %c0_41] : memref<8x1xf32, #tpu.memory_space<vmem>>, vector<8x1xf32>
    tpu.vector_store %arg3[%c0_40, %c0_41], %211 {strides = array<i32>} : memref<8x1xf32, #tpu.memory_space<vmem>>, vector<8x1xf32>,
    return
  }
}

</mosaic_0001>

<llo_original>
// kernel: conv_rnn_forward.1
$region0: #{conv_rnn_forward.1}
  #allocation0 [shape = 'u32[]', space=smem, size = 0x4, offset = 0x4, fixed_abs, tag = 'smem constant byte address 0x4 - core index']
  #allocation1 [shape = 'u32[72,128]{1,0:T(1,128)}', space=vmem, size = 0x9000, scoped, tag = 'internal scratch']
  %s0 = inlined_call_operand.vmem [shape: f32[8,128], index: 0, kind: input, shape index: {}]
  %s1 = inlined_call_operand.hbm [shape: f32[192,384], index: 1, kind: input, shape index: {}]
  %s2 = inlined_call_operand.hbm [shape: f32[8,384], index: 2, kind: input, shape index: {}]
  %s3 = inlined_call_operand.vmem [shape: f32[8,1], index: 3, kind: output, shape index: {}]
  %s4 = sld [smem:[#allocation0]]
  $region30: #{conv_rnn_forward.1} parent=0
    _
  %s6 = ssub.s32 1, %s4
  %s7 = scalar_select 0, %s6, %s4
  $region1: #{conv_rnn_forward.1} parent=0
    #allocation2 [shape = 'u8[294912]{0}', space=vmem, size = 0x48000, scoped, tag = 'input window, operand 1, single buffered']
    #allocation3 [shape = 's32[1]{0}', space=sflag, size = 0x4, scoped, tag = 'scoped memory for conv_rnn_forward.1']
    #allocation4 [shape = 'u8[12288]{0}', space=vmem, size = 0x3000, scoped, tag = 'input window, operand 2, single buffered']
    #allocation5 [shape = 's32[1]{0}', space=sflag, size = 0x4, scoped, tag = 'scoped memory for conv_rnn_forward.1']
    %8 = vsyncpa [#allocation3], 0
    %9 = vsyncpa [#allocation5], 0
    // Predicated region
    $region2: #{conv_rnn_forward.1} parent=1 // pred_check
      _
    $region3: #{conv_rnn_forward.1} parent=1 // pred_check_branch
      %11 = sbr.rel (0) target = $region5
    $region4: #{conv_rnn_forward.1} parent=1 // pred_region
      _
    $region5: #{conv_rnn_forward.1} parent=1 // pred_fallthru
      _
    // Predicated region
    $region6: #{conv_rnn_forward.1} parent=1 // pred_check
      _
    $region7: #{conv_rnn_forward.1} parent=1 // pred_check_branch
      %13 = sbr.rel (0) target = $region9
    $region8: #{conv_rnn_forward.1} parent=1 // pred_region
      %15 = vsyncadd [#allocation3], 0
      %s16 = sshll.u32 %s1, 4
      %s17 = int_to_ptr.hbm [resolvable:$true] %s16
      %s18 = sshll.u32 [#allocation2], 4
      %s19 = int_to_ptr.vmem [resolvable:$true] %s18
      %24 = dma.hbm_to_vmem [thread:$0]  %s17, 9216, %s19, [#allocation3], 384, 384, 24
    $region9: #{conv_rnn_forward.1} parent=1 // pred_fallthru
      _
    // Predicated region
    $region10: #{conv_rnn_forward.1} parent=1 // pred_check
      _
    $region11: #{conv_rnn_forward.1} parent=1 // pred_check_branch
      %26 = sbr.rel (0) target = $region13
    $region12: #{conv_rnn_forward.1} parent=1 // pred_region
      %28 = vsyncadd [#allocation5], 0
      %s30 = sshll.u32 %s2, 4
      %s31 = int_to_ptr.hbm [resolvable:$true] %s30
      %s32 = sshll.u32 [#allocation4], 4
      %s33 = int_to_ptr.vmem [resolvable:$true] %s32
      %35 = dma.hbm_to_vmem [thread:$0]  %s31, 384, %s33, [#allocation5]
    $region13: #{conv_rnn_forward.1} parent=1 // pred_fallthru
      _
    // Predicated region
    $region14: #{conv_rnn_forward.1} parent=1 // pred_check
      _
    $region15: #{conv_rnn_forward.1} parent=1 // pred_check_branch
      %37 = sbr.rel (0) target = $region17
    $region16: #{conv_rnn_forward.1} parent=1 // pred_region
      %39 = dma.done [#allocation3], 9216
    $region17: #{conv_rnn_forward.1} parent=1 // pred_fallthru
      _
    // Predicated region
    $region18: #{conv_rnn_forward.1} parent=1 // pred_check
      _
    $region19: #{conv_rnn_forward.1} parent=1 // pred_check_branch
      %41 = sbr.rel (0) target = $region21
    $region20: #{conv_rnn_forward.1} parent=1 // pred_region
      %43 = dma.done [#allocation5], 384
    $region21: #{conv_rnn_forward.1} parent=1 // pred_fallthru
      _
    %v44 = vld [vmem:[%s0] sm:$0xff]
    %v45 = vld [vmem:[#allocation2] sm:$0xff]
    %v46 = vld [vmem:[#allocation2 + $0x8] sm:$0xff]
    %v47 = vld [vmem:[#allocation2 + $0x10] sm:$0xff]
    %v48 = vld [vmem:[#allocation2 + $0x18] sm:$0xff]
    %v49 = vld [vmem:[#allocation2 + $0x20] sm:$0xff]
    %v50 = vld [vmem:[#allocation2 + $0x28] sm:$0xff]
    %v51 = vld [vmem:[#allocation2 + $0x30] sm:$0xff]
    %v52 = vld [vmem:[#allocation2 + $0x38] sm:$0xff]
    %v53 = vld [vmem:[#allocation2 + $0x40] sm:$0xff]
    %v54 = vld [vmem:[#allocation2 + $0x48] sm:$0xff]
    %v55 = vld [vmem:[#allocation2 + $0x50] sm:$0xff]
    %v56 = vld [vmem:[#allocation2 + $0x58] sm:$0xff]
    %v57 = vld [vmem:[#allocation2 + $0x60] sm:$0xff]
    %v58 = vld [vmem:[#allocation2 + $0x68] sm:$0xff]
    %v59 = vld [vmem:[#allocation2 + $0x70] sm:$0xff]
    %v60 = vld [vmem:[#allocation2 + $0x78] sm:$0xff]
    %v61 = vld [vmem:[#allocation2 + $0x80] sm:$0xff]
    %v62 = vld [vmem:[#allocation2 + $0x88] sm:$0xff]
    %v63 = vld [vmem:[#allocation2 + $0x90] sm:$0xff]
    %v64 = vld [vmem:[#allocation2 + $0x98] sm:$0xff]
    %v65 = vld [vmem:[#allocation2 + $0xa0] sm:$0xff]
    %v66 = vld [vmem:[#allocation2 + $0xa8] sm:$0xff]
    %v67 = vld [vmem:[#allocation2 + $0xb0] sm:$0xff]
    %v68 = vld [vmem:[#allocation2 + $0xb8] sm:$0xff]
    %v69 = vld [vmem:[#allocation2 + $0xc0] sm:$0xff]
    %v70 = vld [vmem:[#allocation2 + $0xc8] sm:$0xff]
    %v71 = vld [vmem:[#allocation2 + $0xd0] sm:$0xff]
    %v72 = vld [vmem:[#allocation2 + $0xd8] sm:$0xff]
    %v73 = vld [vmem:[#allocation2 + $0xe0] sm:$0xff]
    %v74 = vld [vmem:[#allocation2 + $0xe8] sm:$0xff]
    %v75 = vld [vmem:[#allocation2 + $0xf0] sm:$0xff]
    %v76 = vld [vmem:[#allocation2 + $0xf8] sm:$0xff]
    %v77 = vld [vmem:[#allocation2 + $0x100] sm:$0xff]
    %v78 = vld [vmem:[#allocation2 + $0x108] sm:$0xff]
    %v79 = vld [vmem:[#allocation2 + $0x110] sm:$0xff]
    %v80 = vld [vmem:[#allocation2 + $0x118] sm:$0xff]
    %v81 = vld [vmem:[#allocation2 + $0x120] sm:$0xff]
    %v82 = vld [vmem:[#allocation2 + $0x128] sm:$0xff]
    %v83 = vld [vmem:[#allocation2 + $0x130] sm:$0xff]
    %v84 = vld [vmem:[#allocation2 + $0x138] sm:$0xff]
    %v85 = vld [vmem:[#allocation2 + $0x140] sm:$0xff]
    %v86 = vld [vmem:[#allocation2 + $0x148] sm:$0xff]
    %v87 = vld [vmem:[#allocation2 + $0x150] sm:$0xff]
    %v88 = vld [vmem:[#allocation2 + $0x158] sm:$0xff]
    %v89 = vld [vmem:[#allocation2 + $0x160] sm:$0xff]
    %v90 = vld [vmem:[#allocation2 + $0x168] sm:$0xff]
    %v91 = vld [vmem:[#allocation2 + $0x170] sm:$0xff]
    %v92 = vld [vmem:[#allocation2 + $0x178] sm:$0xff]
    %v93 = vld [vmem:[#allocation2 + $0x180] sm:$0xff]
    %v94 = vld [vmem:[#allocation2 + $0x188] sm:$0xff]
    %v95 = vld [vmem:[#allocation2 + $0x190] sm:$0xff]
    %v96 = vld [vmem:[#allocation2 + $0x198] sm:$0xff]
    %v97 = vld [vmem:[#allocation2 + $0x1a0] sm:$0xff]
    %v98 = vld [vmem:[#allocation2 + $0x1a8] sm:$0xff]
    %v99 = vld [vmem:[#allocation2 + $0x1b0] sm:$0xff]
    %v100 = vld [vmem:[#allocation2 + $0x1b8] sm:$0xff]
    %v101 = vld [vmem:[#allocation2 + $0x1c0] sm:$0xff]
    %v102 = vld [vmem:[#allocation2 + $0x1c8] sm:$0xff]
    %v103 = vld [vmem:[#allocation2 + $0x1d0] sm:$0xff]
    %v104 = vld [vmem:[#allocation2 + $0x1d8] sm:$0xff]
    %v105 = vld [vmem:[#allocation2 + $0x1e0] sm:$0xff]
    %v106 = vld [vmem:[#allocation2 + $0x1e8] sm:$0xff]
    %v107 = vld [vmem:[#allocation2 + $0x1f0] sm:$0xff]
    %v108 = vld [vmem:[#allocation2 + $0x1f8] sm:$0xff]
    %v109 = vld [vmem:[#allocation2 + $0x200] sm:$0xff]
    %v110 = vld [vmem:[#allocation2 + $0x208] sm:$0xff]
    %v111 = vld [vmem:[#allocation2 + $0x210] sm:$0xff]
    %v112 = vld [vmem:[#allocation2 + $0x218] sm:$0xff]
    %v113 = vld [vmem:[#allocation2 + $0x220] sm:$0xff]
    %v114 = vld [vmem:[#allocation2 + $0x228] sm:$0xff]
    %v115 = vld [vmem:[#allocation2 + $0x230] sm:$0xff]
    %v116 = vld [vmem:[#allocation2 + $0x238] sm:$0xff]
    %v117 = vld [vmem:[#allocation4] ss:$8 sm:$0x7]
    %v118 = vld [vmem:[#allocation4 + $0x1] ss:$0 sm:$0xff]
    %v119 = vld [vmem:[#allocation4 + $0x2] ss:$0 sm:$0xff]
    %v120 = vld [vmem:[#allocation4 + $0x3] ss:$0 sm:$0xff]
    %v122 = vperm.slane %v117, 0
    %v123 = vperm.slane %v117, 1
    %v124 = vperm.slane %v117, 2
    %vm128 = vcmask 523264
    %v130 = vsel %vm128, %v44, 0
    %132 = vmatpush.msra.mxu0 0.0
    %133 = vmatpush.msra.mxu0 0.0
    %134 = vmatpush.msra.mxu0 0.0
    %135 = vmatpush.msra.mxu0 0.0
    %136 = vmatpush.msra.mxu0 0.0
    %137 = vmatpush.msra.mxu0 0.0
    %138 = vmatpush.msra.mxu0 0.0
    %139 = vmatpush.msra.mxu0 0.0
    %140 = vmatpush.msra.mxu0 %v66
    %141 = vmatpush.msra.mxu0 %v63
    %142 = vmatpush.msra.mxu0 %v60
    %143 = vmatpush.msra.mxu0 %v57
    %144 = vmatpush.msra.mxu0 %v54
    %145 = vmatpush.msra.mxu0 %v51
    %146 = vmatpush.msra.mxu0 %v48
    %147 = vmatpush.msra.mxu0 %v45
    %148 = vmatmul.f32.gmra.mxu0 %v130
    %v149 = vpop.f32.mrf.mxu0
    %v150 = vadd.f32 %v122, %v149
    %151 = vdwg.mxu0
    %152 = vmatpush.msra.mxu0 0.0
    %153 = vmatpush.msra.mxu0 0.0
    %154 = vmatpush.msra.mxu0 0.0
    %155 = vmatpush.msra.mxu0 0.0
    %156 = vmatpush.msra.mxu0 0.0
    %157 = vmatpush.msra.mxu0 0.0
    %158 = vmatpush.msra.mxu0 0.0
    %159 = vmatpush.msra.mxu0 0.0
    %160 = vmatpush.msra.mxu0 %v67
    %161 = vmatpush.msra.mxu0 %v64
    %162 = vmatpush.msra.mxu0 %v61
    %163 = vmatpush.msra.mxu0 %v58
    %164 = vmatpush.msra.mxu0 %v55
    %165 = vmatpush.msra.mxu0 %v52
    %166 = vmatpush.msra.mxu0 %v49
    %167 = vmatpush.msra.mxu0 %v46
    %168 = vmatmul.f32.gmra.mxu0 %v130
    %v169 = vpop.f32.mrf.mxu0
    %v170 = vadd.f32 %v123, %v169
    %171 = vdwg.mxu0
    %172 = vmatpush.msra.mxu0 0.0
    %173 = vmatpush.msra.mxu0 0.0
    %174 = vmatpush.msra.mxu0 0.0
    %175 = vmatpush.msra.mxu0 0.0
    %176 = vmatpush.msra.mxu0 0.0
    %177 = vmatpush.msra.mxu0 0.0
    %178 = vmatpush.msra.mxu0 0.0
    %179 = vmatpush.msra.mxu0 0.0
    %180 = vmatpush.msra.mxu0 %v68
    %181 = vmatpush.msra.mxu0 %v65
    %182 = vmatpush.msra.mxu0 %v62
    %183 = vmatpush.msra.mxu0 %v59
    %184 = vmatpush.msra.mxu0 %v56
    %185 = vmatpush.msra.mxu0 %v53
    %186 = vmatpush.msra.mxu0 %v50
    %187 = vmatpush.msra.mxu0 %v47
    %188 = vmatmul.f32.gmra.mxu0 %v130
    %v189 = vpop.f32.mrf.mxu0
    %v190 = vadd.f32 %v124, %v189
    %191 = vdwg.mxu0
    %192 = vrot.lane.b32.xlu0 %v44, 116
    %v193 = vpop.permute.xlu0 %192
    %v194 = vsel %vm128, %v193, 0
    %196 = vmatpush.msra.mxu0 0.0
    %197 = vmatpush.msra.mxu0 0.0
    %198 = vmatpush.msra.mxu0 0.0
    %199 = vmatpush.msra.mxu0 0.0
    %200 = vmatpush.msra.mxu0 0.0
    %201 = vmatpush.msra.mxu0 0.0
    %202 = vmatpush.msra.mxu0 0.0
    %203 = vmatpush.msra.mxu0 0.0
    %204 = vmatpush.msra.mxu0 %v66
    %205 = vmatpush.msra.mxu0 %v63
    %206 = vmatpush.msra.mxu0 %v60
    %207 = vmatpush.msra.mxu0 %v57
    %208 = vmatpush.msra.mxu0 %v54
    %209 = vmatpush.msra.mxu0 %v51
    %210 = vmatpush.msra.mxu0 %v48
    %211 = vmatpush.msra.mxu0 %v45
    %212 = vmatmul.f32.gmra.mxu0 %v194
    %v213 = vpop.f32.mrf.mxu0
    %v214 = vadd.f32 %v122, %v213
    %215 = vdwg.mxu0
    %216 = vmatpush.msra.mxu0 0.0
    %217 = vmatpush.msra.mxu0 0.0
    %218 = vmatpush.msra.mxu0 0.0
    %219 = vmatpush.msra.mxu0 0.0
    %220 = vmatpush.msra.mxu0 0.0
    %221 = vmatpush.msra.mxu0 0.0
    %222 = vmatpush.msra.mxu0 0.0
    %223 = vmatpush.msra.mxu0 0.0
    %224 = vmatpush.msra.mxu0 %v67
    %225 = vmatpush.msra.mxu0 %v64
    %226 = vmatpush.msra.mxu0 %v61
    %227 = vmatpush.msra.mxu0 %v58
    %228 = vmatpush.msra.mxu0 %v55
    %229 = vmatpush.msra.mxu0 %v52
    %230 = vmatpush.msra.mxu0 %v49
    %231 = vmatpush.msra.mxu0 %v46
    %232 = vmatmul.f32.gmra.mxu0 %v194
    %v233 = vpop.f32.mrf.mxu0
    %v234 = vadd.f32 %v123, %v233
    %235 = vdwg.mxu0
    %236 = vmatpush.msra.mxu0 0.0
    %237 = vmatpush.msra.mxu0 0.0
    %238 = vmatpush.msra.mxu0 0.0
    %239 = vmatpush.msra.mxu0 0.0
    %240 = vmatpush.msra.mxu0 0.0
    %241 = vmatpush.msra.mxu0 0.0
    %242 = vmatpush.msra.mxu0 0.0
    %243 = vmatpush.msra.mxu0 0.0
    %244 = vmatpush.msra.mxu0 %v68
    %245 = vmatpush.msra.mxu0 %v65
    %246 = vmatpush.msra.mxu0 %v62
    %247 = vmatpush.msra.mxu0 %v59
    %248 = vmatpush.msra.mxu0 %v56
    %249 = vmatpush.msra.mxu0 %v53
    %250 = vmatpush.msra.mxu0 %v50
    %251 = vmatpush.msra.mxu0 %v47
    %252 = vmatmul.f32.gmra.mxu0 %v194
    %v253 = vpop.f32.mrf.mxu0
    %v254 = vadd.f32 %v124, %v253
    %255 = vdwg.mxu0
    %256 = vrot.lane.b32.xlu0 %v44, 104
    %v257 = vpop.permute.xlu0 %256
    %v258 = vsel %vm128, %v257, 0
    %260 = vmatpush.msra.mxu0 0.0
    %261 = vmatpush.msra.mxu0 0.0
    %262 = vmatpush.msra.mxu0 0.0
    %263 = vmatpush.msra.mxu0 0.0
    %264 = vmatpush.msra.mxu0 0.0
    %265 = vmatpush.msra.mxu0 0.0
    %266 = vmatpush.msra.mxu0 0.0
    %267 = vmatpush.msra.mxu0 0.0
    %268 = vmatpush.msra.mxu0 %v66
    %269 = vmatpush.msra.mxu0 %v63
    %270 = vmatpush.msra.mxu0 %v60
    %271 = vmatpush.msra.mxu0 %v57
    %272 = vmatpush.msra.mxu0 %v54
    %273 = vmatpush.msra.mxu0 %v51
    %274 = vmatpush.msra.mxu0 %v48
    %275 = vmatpush.msra.mxu0 %v45
    %276 = vmatmul.f32.gmra.mxu0 %v258
    %v277 = vpop.f32.mrf.mxu0
    %v278 = vadd.f32 %v122, %v277
    %279 = vdwg.mxu0
    %280 = vmatpush.msra.mxu0 0.0
    %281 = vmatpush.msra.mxu0 0.0
    %282 = vmatpush.msra.mxu0 0.0
    %283 = vmatpush.msra.mxu0 0.0
    %284 = vmatpush.msra.mxu0 0.0
    %285 = vmatpush.msra.mxu0 0.0
    %286 = vmatpush.msra.mxu0 0.0
    %287 = vmatpush.msra.mxu0 0.0
    %288 = vmatpush.msra.mxu0 %v67
    %289 = vmatpush.msra.mxu0 %v64
    %290 = vmatpush.msra.mxu0 %v61
    %291 = vmatpush.msra.mxu0 %v58
    %292 = vmatpush.msra.mxu0 %v55
    %293 = vmatpush.msra.mxu0 %v52
    %294 = vmatpush.msra.mxu0 %v49
    %295 = vmatpush.msra.mxu0 %v46
    %296 = vmatmul.f32.gmra.mxu0 %v258
    %v297 = vpop.f32.mrf.mxu0
    %v298 = vadd.f32 %v123, %v297
    %299 = vdwg.mxu0
    %300 = vmatpush.msra.mxu0 0.0
    %301 = vmatpush.msra.mxu0 0.0
    %302 = vmatpush.msra.mxu0 0.0
    %303 = vmatpush.msra.mxu0 0.0
    %304 = vmatpush.msra.mxu0 0.0
    %305 = vmatpush.msra.mxu0 0.0
    %306 = vmatpush.msra.mxu0 0.0
    %307 = vmatpush.msra.mxu0 0.0
    %308 = vmatpush.msra.mxu0 %v68
    %309 = vmatpush.msra.mxu0 %v65
    %310 = vmatpush.msra.mxu0 %v62
    %311 = vmatpush.msra.mxu0 %v59
    %312 = vmatpush.msra.mxu0 %v56
    %313 = vmatpush.msra.mxu0 %v53
    %314 = vmatpush.msra.mxu0 %v50
    %315 = vmatpush.msra.mxu0 %v47
    %316 = vmatmul.f32.gmra.mxu0 %v258
    %v317 = vpop.f32.mrf.mxu0
    %v318 = vadd.f32 %v124, %v317
    %319 = vdwg.mxu0
    %320 = vrot.lane.b32.xlu0 %v44, 92
    %v321 = vpop.permute.xlu0 %320
    %v322 = vsel %vm128, %v321, 0
    %324 = vmatpush.msra.mxu0 0.0
    %325 = vmatpush.msra.mxu0 0.0
    %326 = vmatpush.msra.mxu0 0.0
    %327 = vmatpush.msra.mxu0 0.0
    %328 = vmatpush.msra.mxu0 0.0
    %329 = vmatpush.msra.mxu0 0.0
    %330 = vmatpush.msra.mxu0 0.0
    %331 = vmatpush.msra.mxu0 0.0
    %332 = vmatpush.msra.mxu0 %v66
    %333 = vmatpush.msra.mxu0 %v63
    %334 = vmatpush.msra.mxu0 %v60
    %335 = vmatpush.msra.mxu0 %v57
    %336 = vmatpush.msra.mxu0 %v54
    %337 = vmatpush.msra.mxu0 %v51
    %338 = vmatpush.msra.mxu0 %v48
    %339 = vmatpush.msra.mxu0 %v45
    %340 = vmatmul.f32.gmra.mxu0 %v322
    %v341 = vpop.f32.mrf.mxu0
    %v342 = vadd.f32 %v122, %v341
    %343 = vdwg.mxu0
    %344 = vmatpush.msra.mxu0 0.0
    %345 = vmatpush.msra.mxu0 0.0
    %346 = vmatpush.msra.mxu0 0.0
    %347 = vmatpush.msra.mxu0 0.0
    %348 = vmatpush.msra.mxu0 0.0
    %349 = vmatpush.msra.mxu0 0.0
    %350 = vmatpush.msra.mxu0 0.0
    %351 = vmatpush.msra.mxu0 0.0
    %352 = vmatpush.msra.mxu0 %v67
    %353 = vmatpush.msra.mxu0 %v64
    %354 = vmatpush.msra.mxu0 %v61
    %355 = vmatpush.msra.mxu0 %v58
    %356 = vmatpush.msra.mxu0 %v55
    %357 = vmatpush.msra.mxu0 %v52
    %358 = vmatpush.msra.mxu0 %v49
    %359 = vmatpush.msra.mxu0 %v46
    %360 = vmatmul.f32.gmra.mxu0 %v322
    %v361 = vpop.f32.mrf.mxu0
    %v362 = vadd.f32 %v123, %v361
    %363 = vdwg.mxu0
    %364 = vmatpush.msra.mxu0 0.0
    %365 = vmatpush.msra.mxu0 0.0
    %366 = vmatpush.msra.mxu0 0.0
    %367 = vmatpush.msra.mxu0 0.0
    %368 = vmatpush.msra.mxu0 0.0
    %369 = vmatpush.msra.mxu0 0.0
    %370 = vmatpush.msra.mxu0 0.0
    %371 = vmatpush.msra.mxu0 0.0
    %372 = vmatpush.msra.mxu0 %v68
    %373 = vmatpush.msra.mxu0 %v65
    %374 = vmatpush.msra.mxu0 %v62
    %375 = vmatpush.msra.mxu0 %v59
    %376 = vmatpush.msra.mxu0 %v56
    %377 = vmatpush.msra.mxu0 %v53
    %378 = vmatpush.msra.mxu0 %v50
    %379 = vmatpush.msra.mxu0 %v47
    %380 = vmatmul.f32.gmra.mxu0 %v322
    %v381 = vpop.f32.mrf.mxu0
    %v382 = vadd.f32 %v124, %v381
    %383 = vdwg.mxu0
    %384 = vrot.lane.b32.xlu0 %v44, 80
    %v385 = vpop.permute.xlu0 %384
    %v386 = vsel %vm128, %v385, 0
    %388 = vmatpush.msra.mxu0 0.0
    %389 = vmatpush.msra.mxu0 0.0
    %390 = vmatpush.msra.mxu0 0.0
    %391 = vmatpush.msra.mxu0 0.0
    %392 = vmatpush.msra.mxu0 0.0
    %393 = vmatpush.msra.mxu0 0.0
    %394 = vmatpush.msra.mxu0 0.0
    %395 = vmatpush.msra.mxu0 0.0
    %396 = vmatpush.msra.mxu0 %v66
    %397 = vmatpush.msra.mxu0 %v63
    %398 = vmatpush.msra.mxu0 %v60
    %399 = vmatpush.msra.mxu0 %v57
    %400 = vmatpush.msra.mxu0 %v54
    %401 = vmatpush.msra.mxu0 %v51
    %402 = vmatpush.msra.mxu0 %v48
    %403 = vmatpush.msra.mxu0 %v45
    %404 = vmatmul.f32.gmra.mxu0 %v386
    %v405 = vpop.f32.mrf.mxu0
    %v406 = vadd.f32 %v122, %v405
    %407 = vdwg.mxu0
    %408 = vmatpush.msra.mxu0 0.0
    %409 = vmatpush.msra.mxu0 0.0
    %410 = vmatpush.msra.mxu0 0.0
    %411 = vmatpush.msra.mxu0 0.0
    %412 = vmatpush.msra.mxu0 0.0
    %413 = vmatpush.msra.mxu0 0.0
    %414 = vmatpush.msra.mxu0 0.0
    %415 = vmatpush.msra.mxu0 0.0
    %416 = vmatpush.msra.mxu0 %v67
    %417 = vmatpush.msra.mxu0 %v64
    %418 = vmatpush.msra.mxu0 %v61
    %419 = vmatpush.msra.mxu0 %v58
    %420 = vmatpush.msra.mxu0 %v55
    %421 = vmatpush.msra.mxu0 %v52
    %422 = vmatpush.msra.mxu0 %v49
    %423 = vmatpush.msra.mxu0 %v46
    %424 = vmatmul.f32.gmra.mxu0 %v386
    %v425 = vpop.f32.mrf.mxu0
    %v426 = vadd.f32 %v123, %v425
    %427 = vdwg.mxu0
    %428 = vmatpush.msra.mxu0 0.0
    %429 = vmatpush.msra.mxu0 0.0
    %430 = vmatpush.msra.mxu0 0.0
    %431 = vmatpush.msra.mxu0 0.0
    %432 = vmatpush.msra.mxu0 0.0
    %433 = vmatpush.msra.mxu0 0.0
    %434 = vmatpush.msra.mxu0 0.0
    %435 = vmatpush.msra.mxu0 0.0
    %436 = vmatpush.msra.mxu0 %v68
    %437 = vmatpush.msra.mxu0 %v65
    %438 = vmatpush.msra.mxu0 %v62
    %439 = vmatpush.msra.mxu0 %v59
    %440 = vmatpush.msra.mxu0 %v56
    %441 = vmatpush.msra.mxu0 %v53
    %442 = vmatpush.msra.mxu0 %v50
    %443 = vmatpush.msra.mxu0 %v47
    %444 = vmatmul.f32.gmra.mxu0 %v386
    %v445 = vpop.f32.mrf.mxu0
    %v446 = vadd.f32 %v124, %v445
    %447 = vdwg.mxu0
    %448 = vrot.lane.b32.xlu0 %v44, 68
    %v449 = vpop.permute.xlu0 %448
    %v450 = vsel %vm128, %v449, 0
    %452 = vmatpush.msra.mxu0 0.0
    %453 = vmatpush.msra.mxu0 0.0
    %454 = vmatpush.msra.mxu0 0.0
    %455 = vmatpush.msra.mxu0 0.0
    %456 = vmatpush.msra.mxu0 0.0
    %457 = vmatpush.msra.mxu0 0.0
    %458 = vmatpush.msra.mxu0 0.0
    %459 = vmatpush.msra.mxu0 0.0
    %460 = vmatpush.msra.mxu0 %v66
    %461 = vmatpush.msra.mxu0 %v63
    %462 = vmatpush.msra.mxu0 %v60
    %463 = vmatpush.msra.mxu0 %v57
    %464 = vmatpush.msra.mxu0 %v54
    %465 = vmatpush.msra.mxu0 %v51
    %466 = vmatpush.msra.mxu0 %v48
    %467 = vmatpush.msra.mxu0 %v45
    %468 = vmatmul.f32.gmra.mxu0 %v450
    %v469 = vpop.f32.mrf.mxu0
    %v470 = vadd.f32 %v122, %v469
    %471 = vdwg.mxu0
    %472 = vmatpush.msra.mxu0 0.0
    %473 = vmatpush.msra.mxu0 0.0
    %474 = vmatpush.msra.mxu0 0.0
    %475 = vmatpush.msra.mxu0 0.0
    %476 = vmatpush.msra.mxu0 0.0
    %477 = vmatpush.msra.mxu0 0.0
    %478 = vmatpush.msra.mxu0 0.0
    %479 = vmatpush.msra.mxu0 0.0
    %480 = vmatpush.msra.mxu0 %v67
    %481 = vmatpush.msra.mxu0 %v64
    %482 = vmatpush.msra.mxu0 %v61
    %483 = vmatpush.msra.mxu0 %v58
    %484 = vmatpush.msra.mxu0 %v55
    %485 = vmatpush.msra.mxu0 %v52
    %486 = vmatpush.msra.mxu0 %v49
    %487 = vmatpush.msra.mxu0 %v46
    %488 = vmatmul.f32.gmra.mxu0 %v450
    %v489 = vpop.f32.mrf.mxu0
    %v490 = vadd.f32 %v123, %v489
    %491 = vdwg.mxu0
    %492 = vmatpush.msra.mxu0 0.0
    %493 = vmatpush.msra.mxu0 0.0
    %494 = vmatpush.msra.mxu0 0.0
    %495 = vmatpush.msra.mxu0 0.0
    %496 = vmatpush.msra.mxu0 0.0
    %497 = vmatpush.msra.mxu0 0.0
    %498 = vmatpush.msra.mxu0 0.0
    %499 = vmatpush.msra.mxu0 0.0
    %500 = vmatpush.msra.mxu0 %v68
    %501 = vmatpush.msra.mxu0 %v65
    %502 = vmatpush.msra.mxu0 %v62
    %503 = vmatpush.msra.mxu0 %v59
    %504 = vmatpush.msra.mxu0 %v56
    %505 = vmatpush.msra.mxu0 %v53
    %506 = vmatpush.msra.mxu0 %v50
    %507 = vmatpush.msra.mxu0 %v47
    %508 = vmatmul.f32.gmra.mxu0 %v450
    %v509 = vpop.f32.mrf.mxu0
    %v510 = vadd.f32 %v124, %v509
    %511 = vdwg.mxu0
    %512 = vmatpush.msra.mxu0 %v114
    %513 = vmatpush.msra.mxu0 %v111
    %514 = vmatpush.msra.mxu0 %v108
    %515 = vmatpush.msra.mxu0 %v105
    %516 = vmatpush.msra.mxu0 %v102
    %517 = vmatpush.msra.mxu0 %v99
    %518 = vmatpush.msra.mxu0 %v96
    %519 = vmatpush.msra.mxu0 %v93
    %520 = vmatpush.msra.mxu0 %v90
    %521 = vmatpush.msra.mxu0 %v87
    %522 = vmatpush.msra.mxu0 %v84
    %523 = vmatpush.msra.mxu0 %v81
    %524 = vmatpush.msra.mxu0 %v78
    %525 = vmatpush.msra.mxu0 %v75
    %526 = vmatpush.msra.mxu0 %v72
    %527 = vmatpush.msra.mxu0 %v69
    %528 = vmatmul.f32.gmra.mxu0 0.0
    %v529 = vpop.f32.mrf.mxu0
    %v530 = vadd.f32 0.0, %v529
    %531 = vdwg.mxu0
    %532 = vmatpush.msra.mxu0 %v115
    %533 = vmatpush.msra.mxu0 %v112
    %534 = vmatpush.msra.mxu0 %v109
    %535 = vmatpush.msra.mxu0 %v106
    %536 = vmatpush.msra.mxu0 %v103
    %537 = vmatpush.msra.mxu0 %v100
    %538 = vmatpush.msra.mxu0 %v97
    %539 = vmatpush.msra.mxu0 %v94
    %540 = vmatpush.msra.mxu0 %v91
    %541 = vmatpush.msra.mxu0 %v88
    %542 = vmatpush.msra.mxu0 %v85
    %543 = vmatpush.msra.mxu0 %v82
    %544 = vmatpush.msra.mxu0 %v79
    %545 = vmatpush.msra.mxu0 %v76
    %546 = vmatpush.msra.mxu0 %v73
    %547 = vmatpush.msra.mxu0 %v70
    %548 = vmatmul.f32.gmra.mxu0 0.0
    %v549 = vpop.f32.mrf.mxu0
    %v550 = vadd.f32 0.0, %v549
    %551 = vdwg.mxu0
    %552 = vmatpush.msra.mxu0 %v116
    %553 = vmatpush.msra.mxu0 %v113
    %554 = vmatpush.msra.mxu0 %v110
    %555 = vmatpush.msra.mxu0 %v107
    %556 = vmatpush.msra.mxu0 %v104
    %557 = vmatpush.msra.mxu0 %v101
    %558 = vmatpush.msra.mxu0 %v98
    %559 = vmatpush.msra.mxu0 %v95
    %560 = vmatpush.msra.mxu0 %v92
    %561 = vmatpush.msra.mxu0 %v89
    %562 = vmatpush.msra.mxu0 %v86
    %563 = vmatpush.msra.mxu0 %v83
    %564 = vmatpush.msra.mxu0 %v80
    %565 = vmatpush.msra.mxu0 %v77
    %566 = vmatpush.msra.mxu0 %v74
    %567 = vmatpush.msra.mxu0 %v71
    %568 = vmatmul.f32.gmra.mxu0 0.0
    %v569 = vpop.f32.mrf.mxu0
    %v570 = vadd.f32 0.0, %v569
    %571 = vdwg.mxu0
    %v572 = vadd.f32 %v150, %v530
    %v573 = vxor.u32 %v572, 2147483648
    %v574 = vmul.f32 %v573, 1.442695
    %v575 = vpow.pop %v574
    %v576 = vadd.f32 %v575, 1.0
    %v577 = vrcp.pop %v576
    %v578 = vmul.f32 %v576, %v577
    %v579 = vsub.f32 1.0, %v578
    %v580 = vmul.f32 %v577, %v579
    %v581 = vadd.f32 %v577, %v580
    %vm582 = vweird.f32 %v576
    %vm583 = vweird.f32 %v577
    %vm584 = vmor %vm582, %vm583
    %v585 = vsel %vm584, %v577, %v581
    %v586 = vand.u32 2147483647, %v576
    %vm587 = vcmp.eq.f32.partialorder %v586, 8.507059e+37
    %v588 = vand.u32 %v576, 2147483648
    %v589 = vor.u32 1.1754944e-38, %v588
    %v590 = vsel %vm587, %v589, %v585
    %v591 = vmul.f32 1.0, %v590
    %v592 = vadd.f32 %v170, %v550
    %v593 = vxor.u32 %v592, 2147483648
    %v594 = vmul.f32 %v593, 1.442695
    %v595 = vpow.pop %v594
    %v596 = vadd.f32 %v595, 1.0
    %v597 = vrcp.pop %v596
    %v598 = vmul.f32 %v596, %v597
    %v599 = vsub.f32 1.0, %v598
    %v600 = vmul.f32 %v597, %v599
    %v601 = vadd.f32 %v597, %v600
    %vm602 = vweird.f32 %v596
    %vm603 = vweird.f32 %v597
    %vm604 = vmor %vm602, %vm603
    %v605 = vsel %vm604, %v597, %v601
    %v606 = vand.u32 2147483647, %v596
    %vm607 = vcmp.eq.f32.partialorder %v606, 8.507059e+37
    %v608 = vand.u32 %v596, 2147483648
    %v609 = vor.u32 1.1754944e-38, %v608
    %v610 = vsel %vm607, %v609, %v605
    %v611 = vmul.f32 1.0, %v610
    %v612 = vadd.f32 %v570, %v118
    %v613 = vmul.f32 %v591, %v612
    %v614 = vadd.f32 %v190, %v613
    %v615 = vtanh.pop %v614
    %v616 = vsub.f32 1.0, %v611
    %v617 = vmul.f32 %v616, %v615
    %v618 = vmul.f32 %v611, 0.0
    %v619 = vadd.f32 %v617, %v618
    %620 = vmatpush.msra.mxu0 %v114
    %621 = vmatpush.msra.mxu0 %v111
    %622 = vmatpush.msra.mxu0 %v108
    %623 = vmatpush.msra.mxu0 %v105
    %624 = vmatpush.msra.mxu0 %v102
    %625 = vmatpush.msra.mxu0 %v99
    %626 = vmatpush.msra.mxu0 %v96
    %627 = vmatpush.msra.mxu0 %v93
    %628 = vmatpush.msra.mxu0 %v90
    %629 = vmatpush.msra.mxu0 %v87
    %630 = vmatpush.msra.mxu0 %v84
    %631 = vmatpush.msra.mxu0 %v81
    %632 = vmatpush.msra.mxu0 %v78
    %633 = vmatpush.msra.mxu0 %v75
    %634 = vmatpush.msra.mxu0 %v72
    %635 = vmatpush.msra.mxu0 %v69
    %636 = vmatmul.f32.gmra.mxu0 %v619
    %v637 = vpop.f32.mrf.mxu0
    %v638 = vadd.f32 0.0, %v637
    %639 = vdwg.mxu0
    %640 = vmatpush.msra.mxu0 %v115
    %641 = vmatpush.msra.mxu0 %v112
    %642 = vmatpush.msra.mxu0 %v109
    %643 = vmatpush.msra.mxu0 %v106
    %644 = vmatpush.msra.mxu0 %v103
    %645 = vmatpush.msra.mxu0 %v100
    %646 = vmatpush.msra.mxu0 %v97
    %647 = vmatpush.msra.mxu0 %v94
    %648 = vmatpush.msra.mxu0 %v91
    %649 = vmatpush.msra.mxu0 %v88
    %650 = vmatpush.msra.mxu0 %v85
    %651 = vmatpush.msra.mxu0 %v82
    %652 = vmatpush.msra.mxu0 %v79
    %653 = vmatpush.msra.mxu0 %v76
    %654 = vmatpush.msra.mxu0 %v73
    %655 = vmatpush.msra.mxu0 %v70
    %656 = vmatmul.f32.gmra.mxu0 %v619
    %v657 = vpop.f32.mrf.mxu0
    %v658 = vadd.f32 0.0, %v657
    %659 = vdwg.mxu0
    %660 = vmatpush.msra.mxu0 %v116
    %661 = vmatpush.msra.mxu0 %v113
    %662 = vmatpush.msra.mxu0 %v110
    %663 = vmatpush.msra.mxu0 %v107
    %664 = vmatpush.msra.mxu0 %v104
    %665 = vmatpush.msra.mxu0 %v101
    %666 = vmatpush.msra.mxu0 %v98
    %667 = vmatpush.msra.mxu0 %v95
    %668 = vmatpush.msra.mxu0 %v92
    %669 = vmatpush.msra.mxu0 %v89
    %670 = vmatpush.msra.mxu0 %v86
    %671 = vmatpush.msra.mxu0 %v83
    %672 = vmatpush.msra.mxu0 %v80
    %673 = vmatpush.msra.mxu0 %v77
    %674 = vmatpush.msra.mxu0 %v74
    %675 = vmatpush.msra.mxu0 %v71
    %676 = vmatmul.f32.gmra.mxu0 %v619
    %v677 = vpop.f32.mrf.mxu0
    %v678 = vadd.f32 0.0, %v677
    %679 = vdwg.mxu0
    %v680 = vadd.f32 %v214, %v638
    %v681 = vxor.u32 %v680, 2147483648
    %v682 = vmul.f32 %v681, 1.442695
    %v683 = vpow.pop %v682
    %v684 = vadd.f32 %v683, 1.0
    %v685 = vrcp.pop %v684
    %v686 = vmul.f32 %v684, %v685
    %v687 = vsub.f32 1.0, %v686
    %v688 = vmul.f32 %v685, %v687
    %v689 = vadd.f32 %v685, %v688
    %vm690 = vweird.f32 %v684
    %vm691 = vweird.f32 %v685
    %vm692 = vmor %vm690, %vm691
    %v693 = vsel %vm692, %v685, %v689
    %v694 = vand.u32 2147483647, %v684
    %vm695 = vcmp.eq.f32.partialorder %v694, 8.507059e+37
    %v696 = vand.u32 %v684, 2147483648
    %v697 = vor.u32 1.1754944e-38, %v696
    %v698 = vsel %vm695, %v697, %v693
    %v699 = vmul.f32 1.0, %v698
    %v700 = vadd.f32 %v234, %v658
    %v701 = vxor.u32 %v700, 2147483648
    %v702 = vmul.f32 %v701, 1.442695
    %v703 = vpow.pop %v702
    %v704 = vadd.f32 %v703, 1.0
    %v705 = vrcp.pop %v704
    %v706 = vmul.f32 %v704, %v705
    %v707 = vsub.f32 1.0, %v706
    %v708 = vmul.f32 %v705, %v707
    %v709 = vadd.f32 %v705, %v708
    %vm710 = vweird.f32 %v704
    %vm711 = vweird.f32 %v705
    %vm712 = vmor %vm710, %vm711
    %v713 = vsel %vm712, %v705, %v709
    %v714 = vand.u32 2147483647, %v704
    %vm715 = vcmp.eq.f32.partialorder %v714, 8.507059e+37
    %v716 = vand.u32 %v704, 2147483648
    %v717 = vor.u32 1.1754944e-38, %v716
    %v718 = vsel %vm715, %v717, %v713
    %v719 = vmul.f32 1.0, %v718
    %v720 = vadd.f32 %v678, %v118
    %v721 = vmul.f32 %v699, %v720
    %v722 = vadd.f32 %v254, %v721
    %v723 = vtanh.pop %v722
    %v724 = vsub.f32 1.0, %v719
    %v725 = vmul.f32 %v724, %v723
    %v726 = vmul.f32 %v719, %v619
    %v727 = vadd.f32 %v725, %v726
    %728 = vmatpush.msra.mxu0 %v114
    %729 = vmatpush.msra.mxu0 %v111
    %730 = vmatpush.msra.mxu0 %v108
    %731 = vmatpush.msra.mxu0 %v105
    %732 = vmatpush.msra.mxu0 %v102
    %733 = vmatpush.msra.mxu0 %v99
    %734 = vmatpush.msra.mxu0 %v96
    %735 = vmatpush.msra.mxu0 %v93
    %736 = vmatpush.msra.mxu0 %v90
    %737 = vmatpush.msra.mxu0 %v87
    %738 = vmatpush.msra.mxu0 %v84
    %739 = vmatpush.msra.mxu0 %v81
    %740 = vmatpush.msra.mxu0 %v78
    %741 = vmatpush.msra.mxu0 %v75
    %742 = vmatpush.msra.mxu0 %v72
    %743 = vmatpush.msra.mxu0 %v69
    %744 = vmatmul.f32.gmra.mxu0 %v727
    %v745 = vpop.f32.mrf.mxu0
    %v746 = vadd.f32 0.0, %v745
    %747 = vdwg.mxu0
    %748 = vmatpush.msra.mxu0 %v115
    %749 = vmatpush.msra.mxu0 %v112
    %750 = vmatpush.msra.mxu0 %v109
    %751 = vmatpush.msra.mxu0 %v106
    %752 = vmatpush.msra.mxu0 %v103
    %753 = vmatpush.msra.mxu0 %v100
    %754 = vmatpush.msra.mxu0 %v97
    %755 = vmatpush.msra.mxu0 %v94
    %756 = vmatpush.msra.mxu0 %v91
    %757 = vmatpush.msra.mxu0 %v88
    %758 = vmatpush.msra.mxu0 %v85
    %759 = vmatpush.msra.mxu0 %v82
    %760 = vmatpush.msra.mxu0 %v79
    %761 = vmatpush.msra.mxu0 %v76
    %762 = vmatpush.msra.mxu0 %v73
    %763 = vmatpush.msra.mxu0 %v70
    %764 = vmatmul.f32.gmra.mxu0 %v727
    %v765 = vpop.f32.mrf.mxu0
    %v766 = vadd.f32 0.0, %v765
    %767 = vdwg.mxu0
    %768 = vmatpush.msra.mxu0 %v116
    %769 = vmatpush.msra.mxu0 %v113
    %770 = vmatpush.msra.mxu0 %v110
    %771 = vmatpush.msra.mxu0 %v107
    %772 = vmatpush.msra.mxu0 %v104
    %773 = vmatpush.msra.mxu0 %v101
    %774 = vmatpush.msra.mxu0 %v98
    %775 = vmatpush.msra.mxu0 %v95
    %776 = vmatpush.msra.mxu0 %v92
    %777 = vmatpush.msra.mxu0 %v89
    %778 = vmatpush.msra.mxu0 %v86
    %779 = vmatpush.msra.mxu0 %v83
    %780 = vmatpush.msra.mxu0 %v80
    %781 = vmatpush.msra.mxu0 %v77
    %782 = vmatpush.msra.mxu0 %v74
    %783 = vmatpush.msra.mxu0 %v71
    %784 = vmatmul.f32.gmra.mxu0 %v727
    %v785 = vpop.f32.mrf.mxu0
    %v786 = vadd.f32 0.0, %v785
    %787 = vdwg.mxu0
    %v788 = vadd.f32 %v278, %v746
    %v789 = vxor.u32 %v788, 2147483648
    %v790 = vmul.f32 %v789, 1.442695
    %v791 = vpow.pop %v790
    %v792 = vadd.f32 %v791, 1.0
    %v793 = vrcp.pop %v792
    %v794 = vmul.f32 %v792, %v793
    %v795 = vsub.f32 1.0, %v794
    %v796 = vmul.f32 %v793, %v795
    %v797 = vadd.f32 %v793, %v796
    %vm798 = vweird.f32 %v792
    %vm799 = vweird.f32 %v793
    %vm800 = vmor %vm798, %vm799
    %v801 = vsel %vm800, %v793, %v797
    %v802 = vand.u32 2147483647, %v792
    %vm803 = vcmp.eq.f32.partialorder %v802, 8.507059e+37
    %v804 = vand.u32 %v792, 2147483648
    %v805 = vor.u32 1.1754944e-38, %v804
    %v806 = vsel %vm803, %v805, %v801
    %v807 = vmul.f32 1.0, %v806
    %v808 = vadd.f32 %v298, %v766
    %v809 = vxor.u32 %v808, 2147483648
    %v810 = vmul.f32 %v809, 1.442695
    %v811 = vpow.pop %v810
    %v812 = vadd.f32 %v811, 1.0
    %v813 = vrcp.pop %v812
    %v814 = vmul.f32 %v812, %v813
    %v815 = vsub.f32 1.0, %v814
    %v816 = vmul.f32 %v813, %v815
    %v817 = vadd.f32 %v813, %v816
    %vm818 = vweird.f32 %v812
    %vm819 = vweird.f32 %v813
    %vm820 = vmor %vm818, %vm819
    %v821 = vsel %vm820, %v813, %v817
    %v822 = vand.u32 2147483647, %v812
    %vm823 = vcmp.eq.f32.partialorder %v822, 8.507059e+37
    %v824 = vand.u32 %v812, 2147483648
    %v825 = vor.u32 1.1754944e-38, %v824
    %v826 = vsel %vm823, %v825, %v821
    %v827 = vmul.f32 1.0, %v826
    %v828 = vadd.f32 %v786, %v118
    %v829 = vmul.f32 %v807, %v828
    %v830 = vadd.f32 %v318, %v829
    %v831 = vtanh.pop %v830
    %v832 = vsub.f32 1.0, %v827
    %v833 = vmul.f32 %v832, %v831
    %v834 = vmul.f32 %v827, %v727
    %v835 = vadd.f32 %v833, %v834
    %836 = vmatpush.msra.mxu0 %v114
    %837 = vmatpush.msra.mxu0 %v111
    %838 = vmatpush.msra.mxu0 %v108
    %839 = vmatpush.msra.mxu0 %v105
    %840 = vmatpush.msra.mxu0 %v102
    %841 = vmatpush.msra.mxu0 %v99
    %842 = vmatpush.msra.mxu0 %v96
    %843 = vmatpush.msra.mxu0 %v93
    %844 = vmatpush.msra.mxu0 %v90
    %845 = vmatpush.msra.mxu0 %v87
    %846 = vmatpush.msra.mxu0 %v84
    %847 = vmatpush.msra.mxu0 %v81
    %848 = vmatpush.msra.mxu0 %v78
    %849 = vmatpush.msra.mxu0 %v75
    %850 = vmatpush.msra.mxu0 %v72
    %851 = vmatpush.msra.mxu0 %v69
    %852 = vmatmul.f32.gmra.mxu0 %v835
    %v853 = vpop.f32.mrf.mxu0
    %v854 = vadd.f32 0.0, %v853
    %855 = vdwg.mxu0
    %856 = vmatpush.msra.mxu0 %v115
    %857 = vmatpush.msra.mxu0 %v112
    %858 = vmatpush.msra.mxu0 %v109
    %859 = vmatpush.msra.mxu0 %v106
    %860 = vmatpush.msra.mxu0 %v103
    %861 = vmatpush.msra.mxu0 %v100
    %862 = vmatpush.msra.mxu0 %v97
    %863 = vmatpush.msra.mxu0 %v94
    %864 = vmatpush.msra.mxu0 %v91
    %865 = vmatpush.msra.mxu0 %v88
    %866 = vmatpush.msra.mxu0 %v85
    %867 = vmatpush.msra.mxu0 %v82
    %868 = vmatpush.msra.mxu0 %v79
    %869 = vmatpush.msra.mxu0 %v76
    %870 = vmatpush.msra.mxu0 %v73
    %871 = vmatpush.msra.mxu0 %v70
    %872 = vmatmul.f32.gmra.mxu0 %v835
    %v873 = vpop.f32.mrf.mxu0
    %v874 = vadd.f32 0.0, %v873
    %875 = vdwg.mxu0
    %876 = vmatpush.msra.mxu0 %v116
    %877 = vmatpush.msra.mxu0 %v113
    %878 = vmatpush.msra.mxu0 %v110
    %879 = vmatpush.msra.mxu0 %v107
    %880 = vmatpush.msra.mxu0 %v104
    %881 = vmatpush.msra.mxu0 %v101
    %882 = vmatpush.msra.mxu0 %v98
    %883 = vmatpush.msra.mxu0 %v95
    %884 = vmatpush.msra.mxu0 %v92
    %885 = vmatpush.msra.mxu0 %v89
    %886 = vmatpush.msra.mxu0 %v86
    %887 = vmatpush.msra.mxu0 %v83
    %888 = vmatpush.msra.mxu0 %v80
    %889 = vmatpush.msra.mxu0 %v77
    %890 = vmatpush.msra.mxu0 %v74
    %891 = vmatpush.msra.mxu0 %v71
    %892 = vmatmul.f32.gmra.mxu0 %v835
    %v893 = vpop.f32.mrf.mxu0
    %v894 = vadd.f32 0.0, %v893
    %895 = vdwg.mxu0
    %v896 = vadd.f32 %v342, %v854
    %v897 = vxor.u32 %v896, 2147483648
    %v898 = vmul.f32 %v897, 1.442695
    %v899 = vpow.pop %v898
    %v900 = vadd.f32 %v899, 1.0
    %v901 = vrcp.pop %v900
    %v902 = vmul.f32 %v900, %v901
    %v903 = vsub.f32 1.0, %v902
    %v904 = vmul.f32 %v901, %v903
    %v905 = vadd.f32 %v901, %v904
    %vm906 = vweird.f32 %v900
    %vm907 = vweird.f32 %v901
    %vm908 = vmor %vm906, %vm907
    %v909 = vsel %vm908, %v901, %v905
    %v910 = vand.u32 2147483647, %v900
    %vm911 = vcmp.eq.f32.partialorder %v910, 8.507059e+37
    %v912 = vand.u32 %v900, 2147483648
    %v913 = vor.u32 1.1754944e-38, %v912
    %v914 = vsel %vm911, %v913, %v909
    %v915 = vmul.f32 1.0, %v914
    %v916 = vadd.f32 %v362, %v874
    %v917 = vxor.u32 %v916, 2147483648
    %v918 = vmul.f32 %v917, 1.442695
    %v919 = vpow.pop %v918
    %v920 = vadd.f32 %v919, 1.0
    %v921 = vrcp.pop %v920
    %v922 = vmul.f32 %v920, %v921
    %v923 = vsub.f32 1.0, %v922
    %v924 = vmul.f32 %v921, %v923
    %v925 = vadd.f32 %v921, %v924
    %vm926 = vweird.f32 %v920
    %vm927 = vweird.f32 %v921
    %vm928 = vmor %vm926, %vm927
    %v929 = vsel %vm928, %v921, %v925
    %v930 = vand.u32 2147483647, %v920
    %vm931 = vcmp.eq.f32.partialorder %v930, 8.507059e+37
    %v932 = vand.u32 %v920, 2147483648
    %v933 = vor.u32 1.1754944e-38, %v932
    %v934 = vsel %vm931, %v933, %v929
    %v935 = vmul.f32 1.0, %v934
    %v936 = vadd.f32 %v894, %v118
    %v937 = vmul.f32 %v915, %v936
    %v938 = vadd.f32 %v382, %v937
    %v939 = vtanh.pop %v938
    %v940 = vsub.f32 1.0, %v935
    %v941 = vmul.f32 %v940, %v939
    %v942 = vmul.f32 %v935, %v835
    %v943 = vadd.f32 %v941, %v942
    %944 = vmatpush.msra.mxu0 %v114
    %945 = vmatpush.msra.mxu0 %v111
    %946 = vmatpush.msra.mxu0 %v108
    %947 = vmatpush.msra.mxu0 %v105
    %948 = vmatpush.msra.mxu0 %v102
    %949 = vmatpush.msra.mxu0 %v99
    %950 = vmatpush.msra.mxu0 %v96
    %951 = vmatpush.msra.mxu0 %v93
    %952 = vmatpush.msra.mxu0 %v90
    %953 = vmatpush.msra.mxu0 %v87
    %954 = vmatpush.msra.mxu0 %v84
    %955 = vmatpush.msra.mxu0 %v81
    %956 = vmatpush.msra.mxu0 %v78
    %957 = vmatpush.msra.mxu0 %v75
    %958 = vmatpush.msra.mxu0 %v72
    %959 = vmatpush.msra.mxu0 %v69
    %960 = vmatmul.f32.gmra.mxu0 %v943
    %v961 = vpop.f32.mrf.mxu0
    %v962 = vadd.f32 0.0, %v961
    %963 = vdwg.mxu0
    %964 = vmatpush.msra.mxu0 %v115
    %965 = vmatpush.msra.mxu0 %v112
    %966 = vmatpush.msra.mxu0 %v109
    %967 = vmatpush.msra.mxu0 %v106
    %968 = vmatpush.msra.mxu0 %v103
    %969 = vmatpush.msra.mxu0 %v100
    %970 = vmatpush.msra.mxu0 %v97
    %971 = vmatpush.msra.mxu0 %v94
    %972 = vmatpush.msra.mxu0 %v91
    %973 = vmatpush.msra.mxu0 %v88
    %974 = vmatpush.msra.mxu0 %v85
    %975 = vmatpush.msra.mxu0 %v82
    %976 = vmatpush.msra.mxu0 %v79
    %977 = vmatpush.msra.mxu0 %v76
    %978 = vmatpush.msra.mxu0 %v73
    %979 = vmatpush.msra.mxu0 %v70
    %980 = vmatmul.f32.gmra.mxu0 %v943
    %v981 = vpop.f32.mrf.mxu0
    %v982 = vadd.f32 0.0, %v981
    %983 = vdwg.mxu0
    %984 = vmatpush.msra.mxu0 %v116
    %985 = vmatpush.msra.mxu0 %v113
    %986 = vmatpush.msra.mxu0 %v110
    %987 = vmatpush.msra.mxu0 %v107
    %988 = vmatpush.msra.mxu0 %v104
    %989 = vmatpush.msra.mxu0 %v101
    %990 = vmatpush.msra.mxu0 %v98
    %991 = vmatpush.msra.mxu0 %v95
    %992 = vmatpush.msra.mxu0 %v92
    %993 = vmatpush.msra.mxu0 %v89
    %994 = vmatpush.msra.mxu0 %v86
    %995 = vmatpush.msra.mxu0 %v83
    %996 = vmatpush.msra.mxu0 %v80
    %997 = vmatpush.msra.mxu0 %v77
    %998 = vmatpush.msra.mxu0 %v74
    %999 = vmatpush.msra.mxu0 %v71
    %1000 = vmatmul.f32.gmra.mxu0 %v943
    %v1001 = vpop.f32.mrf.mxu0
    %v1002 = vadd.f32 0.0, %v1001
    %1003 = vdwg.mxu0
    %v1004 = vadd.f32 %v406, %v962
    %v1005 = vxor.u32 %v1004, 2147483648
    %v1006 = vmul.f32 %v1005, 1.442695
    %v1007 = vpow.pop %v1006
    %v1008 = vadd.f32 %v1007, 1.0
    %v1009 = vrcp.pop %v1008
    %v1010 = vmul.f32 %v1008, %v1009
    %v1011 = vsub.f32 1.0, %v1010
    %v1012 = vmul.f32 %v1009, %v1011
    %v1013 = vadd.f32 %v1009, %v1012
    %vm1014 = vweird.f32 %v1008
    %vm1015 = vweird.f32 %v1009
    %vm1016 = vmor %vm1014, %vm1015
    %v1017 = vsel %vm1016, %v1009, %v1013
    %v1018 = vand.u32 2147483647, %v1008
    %vm1019 = vcmp.eq.f32.partialorder %v1018, 8.507059e+37
    %v1020 = vand.u32 %v1008, 2147483648
    %v1021 = vor.u32 1.1754944e-38, %v1020
    %v1022 = vsel %vm1019, %v1021, %v1017
    %v1023 = vmul.f32 1.0, %v1022
    %v1024 = vadd.f32 %v426, %v982
    %v1025 = vxor.u32 %v1024, 2147483648
    %v1026 = vmul.f32 %v1025, 1.442695
    %v1027 = vpow.pop %v1026
    %v1028 = vadd.f32 %v1027, 1.0
    %v1029 = vrcp.pop %v1028
    %v1030 = vmul.f32 %v1028, %v1029
    %v1031 = vsub.f32 1.0, %v1030
    %v1032 = vmul.f32 %v1029, %v1031
    %v1033 = vadd.f32 %v1029, %v1032
    %vm1034 = vweird.f32 %v1028
    %vm1035 = vweird.f32 %v1029
    %vm1036 = vmor %vm1034, %vm1035
    %v1037 = vsel %vm1036, %v1029, %v1033
    %v1038 = vand.u32 2147483647, %v1028
    %vm1039 = vcmp.eq.f32.partialorder %v1038, 8.507059e+37
    %v1040 = vand.u32 %v1028, 2147483648
    %v1041 = vor.u32 1.1754944e-38, %v1040
    %v1042 = vsel %vm1039, %v1041, %v1037
    %v1043 = vmul.f32 1.0, %v1042
    %v1044 = vadd.f32 %v1002, %v118
    %v1045 = vmul.f32 %v1023, %v1044
    %v1046 = vadd.f32 %v446, %v1045
    %v1047 = vtanh.pop %v1046
    %v1048 = vsub.f32 1.0, %v1043
    %v1049 = vmul.f32 %v1048, %v1047
    %v1050 = vmul.f32 %v1043, %v943
    %v1051 = vadd.f32 %v1049, %v1050
    %1052 = vmatpush.msra.mxu0 %v114
    %1053 = vmatpush.msra.mxu0 %v111
    %1054 = vmatpush.msra.mxu0 %v108
    %1055 = vmatpush.msra.mxu0 %v105
    %1056 = vmatpush.msra.mxu0 %v102
    %1057 = vmatpush.msra.mxu0 %v99
    %1058 = vmatpush.msra.mxu0 %v96
    %1059 = vmatpush.msra.mxu0 %v93
    %1060 = vmatpush.msra.mxu0 %v90
    %1061 = vmatpush.msra.mxu0 %v87
    %1062 = vmatpush.msra.mxu0 %v84
    %1063 = vmatpush.msra.mxu0 %v81
    %1064 = vmatpush.msra.mxu0 %v78
    %1065 = vmatpush.msra.mxu0 %v75
    %1066 = vmatpush.msra.mxu0 %v72
    %1067 = vmatpush.msra.mxu0 %v69
    %1068 = vmatmul.f32.gmra.mxu0 %v1051
    %v1069 = vpop.f32.mrf.mxu0
    %v1070 = vadd.f32 0.0, %v1069
    %1071 = vdwg.mxu0
    %1072 = vmatpush.msra.mxu0 %v115
    %1073 = vmatpush.msra.mxu0 %v112
    %1074 = vmatpush.msra.mxu0 %v109
    %1075 = vmatpush.msra.mxu0 %v106
    %1076 = vmatpush.msra.mxu0 %v103
    %1077 = vmatpush.msra.mxu0 %v100
    %1078 = vmatpush.msra.mxu0 %v97
    %1079 = vmatpush.msra.mxu0 %v94
    %1080 = vmatpush.msra.mxu0 %v91
    %1081 = vmatpush.msra.mxu0 %v88
    %1082 = vmatpush.msra.mxu0 %v85
    %1083 = vmatpush.msra.mxu0 %v82
    %1084 = vmatpush.msra.mxu0 %v79
    %1085 = vmatpush.msra.mxu0 %v76
    %1086 = vmatpush.msra.mxu0 %v73
    %1087 = vmatpush.msra.mxu0 %v70
    %1088 = vmatmul.f32.gmra.mxu0 %v1051
    %v1089 = vpop.f32.mrf.mxu0
    %v1090 = vadd.f32 0.0, %v1089
    %1091 = vdwg.mxu0
    %1092 = vmatpush.msra.mxu0 %v116
    %1093 = vmatpush.msra.mxu0 %v113
    %1094 = vmatpush.msra.mxu0 %v110
    %1095 = vmatpush.msra.mxu0 %v107
    %1096 = vmatpush.msra.mxu0 %v104
    %1097 = vmatpush.msra.mxu0 %v101
    %1098 = vmatpush.msra.mxu0 %v98
    %1099 = vmatpush.msra.mxu0 %v95
    %1100 = vmatpush.msra.mxu0 %v92
    %1101 = vmatpush.msra.mxu0 %v89
    %1102 = vmatpush.msra.mxu0 %v86
    %1103 = vmatpush.msra.mxu0 %v83
    %1104 = vmatpush.msra.mxu0 %v80
    %1105 = vmatpush.msra.mxu0 %v77
    %1106 = vmatpush.msra.mxu0 %v74
    %1107 = vmatpush.msra.mxu0 %v71
    %1108 = vmatmul.f32.gmra.mxu0 %v1051
    %v1109 = vpop.f32.mrf.mxu0
    %v1110 = vadd.f32 0.0, %v1109
    %1111 = vdwg.mxu0
    %v1112 = vadd.f32 %v470, %v1070
    %v1113 = vxor.u32 %v1112, 2147483648
    %v1114 = vmul.f32 %v1113, 1.442695
    %v1115 = vpow.pop %v1114
    %v1116 = vadd.f32 %v1115, 1.0
    %v1117 = vrcp.pop %v1116
    %v1118 = vmul.f32 %v1116, %v1117
    %v1119 = vsub.f32 1.0, %v1118
    %v1120 = vmul.f32 %v1117, %v1119
    %v1121 = vadd.f32 %v1117, %v1120
    %vm1122 = vweird.f32 %v1116
    %vm1123 = vweird.f32 %v1117
    %vm1124 = vmor %vm1122, %vm1123
    %v1125 = vsel %vm1124, %v1117, %v1121
    %v1126 = vand.u32 2147483647, %v1116
    %vm1127 = vcmp.eq.f32.partialorder %v1126, 8.507059e+37
    %v1128 = vand.u32 %v1116, 2147483648
    %v1129 = vor.u32 1.1754944e-38, %v1128
    %v1130 = vsel %vm1127, %v1129, %v1125
    %v1131 = vmul.f32 1.0, %v1130
    %v1132 = vadd.f32 %v490, %v1090
    %v1133 = vxor.u32 %v1132, 2147483648
    %v1134 = vmul.f32 %v1133, 1.442695
    %v1135 = vpow.pop %v1134
    %v1136 = vadd.f32 %v1135, 1.0
    %v1137 = vrcp.pop %v1136
    %v1138 = vmul.f32 %v1136, %v1137
    %v1139 = vsub.f32 1.0, %v1138
    %v1140 = vmul.f32 %v1137, %v1139
    %v1141 = vadd.f32 %v1137, %v1140
    %vm1142 = vweird.f32 %v1136
    %vm1143 = vweird.f32 %v1137
    %vm1144 = vmor %vm1142, %vm1143
    %v1145 = vsel %vm1144, %v1137, %v1141
    %v1146 = vand.u32 2147483647, %v1136
    %vm1147 = vcmp.eq.f32.partialorder %v1146, 8.507059e+37
    %v1148 = vand.u32 %v1136, 2147483648
    %v1149 = vor.u32 1.1754944e-38, %v1148
    %v1150 = vsel %vm1147, %v1149, %v1145
    %v1151 = vmul.f32 1.0, %v1150
    %v1152 = vadd.f32 %v1110, %v118
    %v1153 = vmul.f32 %v1131, %v1152
    %v1154 = vadd.f32 %v510, %v1153
    %v1155 = vtanh.pop %v1154
    %v1156 = vsub.f32 1.0, %v1151
    %v1157 = vmul.f32 %v1156, %v1155
    %v1158 = vmul.f32 %v1151, %v1051
    %v1159 = vadd.f32 %v1157, %v1158
    %v1160 = vmul.f32 %v1159, %v119
    %1161 = vadd.xlane.f32.xlu0 %v1160
    %v1162 = vpop.xlane.xlu0 %1161
    %v1163 = vadd.f32 %v1162, %v120
    %vm1164 = vcmask 7168
    %1165 = vst.msk [vmem:[%s3] sm:$0xff] %vm1164, %v1163
    // Predicated region
    $region22: #{conv_rnn_forward.1} parent=1 // pred_check
      _
    $region23: #{conv_rnn_forward.1} parent=1 // pred_check_branch
      %1167 = sbr.rel (0) target = $region25
    $region24: #{conv_rnn_forward.1} parent=1 // pred_region
      _
    $region25: #{conv_rnn_forward.1} parent=1 // pred_fallthru
      _
    // Predicated region
    $region26: #{conv_rnn_forward.1} parent=1 // pred_check
      _
    $region27: #{conv_rnn_forward.1} parent=1 // pred_check_branch
      %1169 = sbr.rel (0) target = $region29
    $region28: #{conv_rnn_forward.1} parent=1 // pred_region
      _
    $region29: #{conv_rnn_forward.1} parent=1 // pred_fallthru
      _
    %1170 = vsyncpa [#allocation3], 1
    %1171 = vsyncpa [#allocation5], 1

</llo_original>
